<compile_context>
chip_gen: v7x
topology: tpu7x:2x2x1
jax: 0.10.0
libtpu: 0.0.40
codegen_flags: <defaults>
</compile_context>

<pallas_src>
import numpy as np
import jax
import jax.numpy as jnp
from jax.experimental import pallas as pl
from jax.experimental.pallas import tpu as pltpu

MAX_TILE_N = 4096                  # conv points per grid step (>= ~1 MB gathered input)
BN_MAX_ROWS = 8192                 # rows (of 128 lanes) per bn_relu grid step (~4 MB f32)
_VMEM_LIMIT = 32 * 1024 * 1024     # scoped VMEM budget, safe on v5e / v6e / v7x


def _round_up(x, m):
    return ((x + m - 1) // m) * m


def _pad_and_tile(n):
    """Pick (Npad, tile_n): big tiles, whole problem in one tile when small."""
    npad = _round_up(n, 512)
    if npad <= MAX_TILE_N:
        return npad, npad
    npad = _round_up(n, MAX_TILE_N)
    return npad, MAX_TILE_N


# ----------------------------- Pallas kernels ------------------------------ #

def _conv_stats_kernel(g_ref, w_ref, o_ref, stats_ref):
    """Flattened sparse-conv matmul + fused per-tile BN partial statistics.

    g_ref:     (TILE_N, KCpad) bf16 gathered features (zeros where no neighbor / pad)
    w_ref:     (KCpad, Cout)   bf16 flattened, zero-row-padded conv weight
    o_ref:     (TILE_N, Cout)  f32 conv output
    stats_ref: (8, Cout)       f32; row 0 = sum(acc), row 1 = sum(acc^2), rest zero
    """
    acc = jnp.dot(g_ref[...], w_ref[...], preferred_element_type=jnp.float32)
    o_ref[...] = acc.astype(o_ref.dtype)
    stats_ref[...] = jnp.zeros_like(stats_ref)
    stats_ref[0:1, :] = jnp.sum(acc, axis=0, keepdims=True)
    stats_ref[1:2, :] = jnp.sum(acc * acc, axis=0, keepdims=True)


def sparse_conv_matmul(gathered_flat, w_flat, tile_n):
    """gathered_flat: (Npad, KCpad) bf16; w_flat: (KCpad, Cout) bf16.

    Returns (conv_out (Npad, Cout) f32, stats (num_tiles*8, Cout) f32)."""
    npad, kc = gathered_flat.shape
    cout = w_flat.shape[-1]
    num_tiles = npad // tile_n
    return pl.pallas_call(
        _conv_stats_kernel,
        out_shape=(jax.ShapeDtypeStruct((npad, cout), jnp.float32),
                   jax.ShapeDtypeStruct((num_tiles * 8, cout), jnp.float32)),
        grid_spec=pltpu.PrefetchScalarGridSpec(
            num_scalar_prefetch=0,
            grid=(num_tiles,),
            in_specs=[
                pl.BlockSpec((tile_n, kc), lambda i: (i, 0)),
                pl.BlockSpec((kc, cout), lambda i: (0, 0)),
            ],
            out_specs=(
                pl.BlockSpec((tile_n, cout), lambda i: (i, 0)),
                pl.BlockSpec((8, cout), lambda i: (i, 0)),
            ),
        ),
        compiler_params=pltpu.CompilerParams(
            dimension_semantics=("parallel",),   # shards tiles across TCs on v7x
            vmem_limit_bytes=_VMEM_LIMIT),
    )(gathered_flat, w_flat)


def _bn_relu_kernel(x_ref, scale_ref, bias_ref, o_ref):
    x = x_ref[...].astype(jnp.float32)
    o_ref[...] = jnp.maximum(x * scale_ref[...] + bias_ref[...], 0.0)


def bn_relu(x, scale, bias):
    """y = relu(x * scale + bias) on a lane-dense view, output aliased onto x.

    x: (Npad, C) f32; scale/bias: (C,) f32. When C divides 128 the array is viewed
    as (Npad/pack, pack*C) with pack = 128//C so every vreg lane / store is used."""
    npad, c = x.shape
    if c <= 128 and 128 % c == 0 and npad % (128 // c) == 0:
        pack = 128 // c
    else:
        pack = 1                       # fallback: masked stores, still correct
    rows, lanes = npad // pack, pack * c
    xd = x.reshape(rows, lanes)
    sd = jnp.tile(scale, pack)[None, :]
    bd = jnp.tile(bias, pack)[None, :]

    # big elementwise blocks: single block when the whole array fits, else halve
    tile_r = rows
    while tile_r > BN_MAX_ROWS and tile_r % 2 == 0:
        tile_r //= 2
    num_tiles = rows // tile_r

    y = pl.pallas_call(
        _bn_relu_kernel,
        out_shape=jax.ShapeDtypeStruct((rows, lanes), jnp.float32),
        grid_spec=pltpu.PrefetchScalarGridSpec(
            num_scalar_prefetch=0,
            grid=(num_tiles,),
            in_specs=[
                pl.BlockSpec((tile_r, lanes), lambda i: (i, 0)),
                pl.BlockSpec((1, lanes), lambda i: (0, 0)),
                pl.BlockSpec((1, lanes), lambda i: (0, 0)),
            ],
            out_specs=pl.BlockSpec((tile_r, lanes), lambda i: (i, 0)),
        ),
        input_output_aliases={0: 0},   # write the activations in-place over conv_out
        compiler_params=pltpu.CompilerParams(
            dimension_semantics=("parallel",),
            vmem_limit_bytes=_VMEM_LIMIT),
    )(xd, sd, bd)
    return y.reshape(npad, c)


# ----------------------------- Module wrapper ------------------------------ #

class BasicConvolutionBlock:
    """JAX/Pallas port of the PyTorch BasicConvolutionBlock (stride=1, submanifold-style)."""

    def __init__(self, inc, outc, ks=3, stride=1, dilation=1, if_dist=False, *, key):
        assert stride == 1, "TODO(synk): strided sparse conv (coord downsampling) not implemented"
        self.inc, self.outc, self.ks, self.dilation = inc, outc, ks, dilation
        self.eps = 1e-5  # nn.BatchNorm1d default

        offs_1d = np.arange(ks) - ks // 2
        self.offsets = np.array(
            [(dx * dilation, dy * dilation, dz * dilation)
             for dx in offs_1d for dy in offs_1d for dz in offs_1d],
            dtype=np.int32)                                  # (K, 3)
        K = self.offsets.shape[0]
        kc = K * inc
        self.kc_pad = _round_up(kc, 128)                     # aligned MXU contraction

        kw, kg, kb = jax.random.split(key, 3)
        self.weight = (jax.random.normal(kw, (K, inc, outc), jnp.float32)
                       / np.sqrt(kc))                        # spnn.Conv3d kernel (K, Cin, Cout)
        # flattened, zero-row-padded bf16 copy fed to the MXU kernel
        w_flat = self.weight.reshape(kc, outc)
        w_flat = jnp.pad(w_flat, ((0, self.kc_pad - kc), (0, 0)))
        self.w_flat = w_flat.astype(jnp.bfloat16)
        self.gamma = 1.0 + 0.1 * jax.random.normal(kg, (outc,), jnp.float32)
        self.beta = 0.1 * jax.random.normal(kb, (outc,), jnp.float32)

        self._nbr_cache = {}                                 # rulebook cache per geometry

    # --- glue: vectorized rulebook (kernel map) construction, host side --- #
    # TODO(synk): build this on device (jnp sort + searchsorted) to keep it fully
    #             off the host; for now it is cached per coords geometry.
    def _build_neighbor_table(self, coords_np):
        """coords_np: (N, 4) int rows of [batch, x, y, z]. Returns nbr (N, K) int32, -1 = missing."""
        coords_np = np.ascontiguousarray(np.asarray(coords_np, dtype=np.int64))
        cache_key = (coords_np.shape, coords_np.tobytes())
        hit = self._nbr_cache.get(cache_key)
        if hit is not None:
            return hit

        N = coords_np.shape[0]
        K = self.offsets.shape[0]
        R = int(np.abs(self.offsets).max()) if K > 0 else 0
        mn = int(coords_np[:, 1:].min())
        mx = int(coords_np[:, 1:].max())
        base = mx - mn + 1 + 2 * R
        shift = -mn + R

        def encode(c):
            s = c[:, 1:] + shift
            return ((c[:, 0] * base + s[:, 0]) * base + s[:, 1]) * base + s[:, 2]

        keys = encode(coords_np)
        order = np.argsort(keys, kind="stable")
        skeys = keys[order]

        nbr = np.full((N, K), -1, dtype=np.int32)
        for k, off in enumerate(self.offsets):
            q = coords_np.copy()
            q[:, 1:] += off[None, :].astype(np.int64)
            qk = encode(q)
            pos = np.searchsorted(skeys, qk)
            posc = np.clip(pos, 0, N - 1)
            valid = skeys[posc] == qk
            nbr[:, k] = np.where(valid, order[posc], -1)

        if len(self._nbr_cache) > 8:
            self._nbr_cache.clear()
        self._nbr_cache[cache_key] = nbr
        return nbr

    # --- glue: on-device gather + flatten K into the contraction (bf16) --- #
    # TODO(synk): move this gather into the conv kernel (27x HBM traffic reduction).
    def _gather_flat(self, feats, nbr, npad):
        N, K = nbr.shape
        idx = jnp.asarray(nbr)                          # (N, K)
        mask = idx >= 0
        safe = jnp.maximum(idx, 0)
        fb = feats.astype(jnp.bfloat16)
        g = jnp.take(fb, safe, axis=0)                  # (N, K, Cin) bf16
        g = jnp.where(mask[..., None], g, jnp.zeros_like(g))
        g = g.reshape(N, K * self.inc)                  # (N, K*Cin), k-major then c
        # pad rows to the tile grid and columns to the 128-aligned contraction
        g = jnp.pad(g, ((0, npad - N), (0, self.kc_pad - K * self.inc)))
        return g

    def __call__(self, feats, coords):
        N = feats.shape[0]
        nbr = self._build_neighbor_table(np.asarray(coords))
        npad, tile_n = _pad_and_tile(N)
        g_flat = self._gather_flat(feats, nbr, npad)

        conv_out, stats = sparse_conv_matmul(g_flat, self.w_flat, tile_n)

        # BatchNorm1d (training-mode forward): batch statistics over the N valid
        # points, biased variance. Padded rows contribute exact zeros to the sums.
        stats = stats.reshape(-1, 8, self.outc)
        total_sum = jnp.sum(stats[:, 0, :], axis=0)
        total_sq = jnp.sum(stats[:, 1, :], axis=0)
        mean = total_sum / N
        var = jnp.maximum(total_sq / N - mean * mean, 0.0)   # clamp f32 cancellation
        scale = self.gamma / jnp.sqrt(var + self.eps)
        bias = self.beta - mean * scale

        out = bn_relu(conv_out, scale, bias)             # fused BN-affine + ReLU (lane-dense)
        return out[:N]


# ---------------------------------- main ----------------------------------- #

if __name__ == "__main__":
    root = jax.random.PRNGKey(0)
    k_feat, k_sel0, k_sel1, k_param = jax.random.split(root, 4)

    inc, outc, ks = 4, 8, 3
    grid = 8                       # voxels live on an 8x8x8 grid per batch element
    pts_per_batch = 300
    batch = 2

    # build sparse coordinates: random subset of the grid per batch element
    coords_list = []
    for b, ksel in enumerate((k_sel0, k_sel1)):
        flat = np.asarray(jax.random.permutation(ksel, grid ** 3))[:pts_per_batch]
        xs, ys, zs = flat // (grid * grid), (flat // grid) % grid, flat % grid
        coords_list.append(np.stack([np.full_like(xs, b), xs, ys, zs], axis=1))
    coords = np.concatenate(coords_list, axis=0).astype(np.int32)   # (N, 4)
    N = coords.shape[0]

    feats = jax.random.normal(k_feat, (N, inc), jnp.float32)        # (N, Cin)

    block = BasicConvolutionBlock(inc, outc, ks=ks, stride=1, dilation=1,
                                  if_dist=False, key=k_param)

    out = block(feats, coords)
    out = jax.block_until_ready(out)

    # pure-JAX reference (same bf16 rounding of the matmul operands, f32 accumulation)
    nbr = block._build_neighbor_table(coords)
    mask = (nbr >= 0).astype(np.float32)[..., None]                 # (N, K, 1)
    g_np = np.asarray(feats)[np.maximum(nbr, 0)] * mask             # (N, K, Cin)
    gf_b = jnp.asarray(g_np.reshape(N, -1)).astype(jnp.bfloat16).astype(jnp.float32)
    w_b = jnp.asarray(block.weight.reshape(-1, outc)).astype(jnp.bfloat16).astype(jnp.float32)
    ref_conv = gf_b @ w_b                                           # (N, Cout) f32
    mean = jnp.mean(ref_conv, axis=0)
    var = jnp.var(ref_conv, axis=0)
    ref_scale = block.gamma / jnp.sqrt(var + block.eps)
    ref_bias = block.beta - mean * ref_scale
    ref = jnp.maximum(ref_conv * ref_scale + ref_bias, 0.0)

    assert out.shape == (N, outc)
    assert bool(jnp.allclose(out, ref, atol=2e-3, rtol=2e-3))

    print("KERNEL_OK")
</pallas_src>

<mosaic_0001>
module attributes {stable_mosaic.version = 11 : i64} {
  func.func @_conv_stats_kernel(%arg0: i32, %arg1: memref<1024x128xbf16, #tpu.memory_space<vmem>>, %arg2: memref<128x8xbf16, #tpu.memory_space<vmem>>, %arg3: memref<1024x8xf32, #tpu.memory_space<vmem>>, %arg4: memref<8x8xf32, #tpu.memory_space<vmem>>) attributes {dimension_semantics = [#tpu.dimension_semantics<parallel>], iteration_bounds = array<i64: 1>, scalar_prefetch = 0 : i64, scratch_operands = 0 : i64, tpu.core_type = #tpu.core_type<tc>, window_params = [{transform_indices = @transform_0, window_bounds = array<i64: 1024, 128>}, {pipeline_mode = #tpu.pipeline_mode<synchronous>, transform_indices = @transform_1, window_bounds = array<i64: 128, 8>}, {transform_indices = @transform_2, window_bounds = array<i64: 1024, 8>}, {transform_indices = @transform_3, window_bounds = array<i64: 8, 8>}]} {
    %c0 = arith.constant 0 : index
    %c0_0 = arith.constant 0 : index
    %0 = vector.load %arg1[%c0, %c0_0] : memref<1024x128xbf16, #tpu.memory_space<vmem>>, vector<1024x128xbf16>
    %c0_1 = arith.constant 0 : index
    %c0_2 = arith.constant 0 : index
    %1 = vector.load %arg2[%c0_1, %c0_2] : memref<128x8xbf16, #tpu.memory_space<vmem>>, vector<128x8xbf16>
    %cst = arith.constant dense<0.000000e+00> : vector<1024x8xf32>
    %2 = tpu.matmul %0, %1, %cst {dimension_numbers = #tpu.dot_dimension_numbers<[1], [0], [0], [1], [0, 0, 1, 1], [], []>} : vector<1024x128xbf16>, vector<128x8xbf16>, vector<1024x8xf32> -> vector<1024x8xf32>
    %c0_3 = arith.constant 0 : index
    %c0_4 = arith.constant 0 : index
    %3 = vector.load %arg3[%c0_3, %c0_4] : memref<1024x8xf32, #tpu.memory_space<vmem>>, vector<1024x8xf32>
    tpu.vector_store %arg3[%c0_3, %c0_4], %2 {strides = array<i32>} : memref<1024x8xf32, #tpu.memory_space<vmem>>, vector<1024x8xf32>,
    %cst_5 = arith.constant 0.000000e+00 : f32
    %4 = vector.broadcast %cst_5 : f32 to vector<8x8xf32>
    %c0_6 = arith.constant 0 : index
    %c0_7 = arith.constant 0 : index
    %5 = vector.load %arg4[%c0_6, %c0_7] : memref<8x8xf32, #tpu.memory_space<vmem>>, vector<8x8xf32>
    tpu.vector_store %arg4[%c0_6, %c0_7], %4 {strides = array<i32>} : memref<8x8xf32, #tpu.memory_space<vmem>>, vector<8x8xf32>,
    %cst_8 = arith.constant dense<0.000000e+00> : vector<8xf32>
    %6 = vector.multi_reduction <add>, %2, %cst_8 [0] : vector<1024x8xf32> to vector<8xf32>
    %7 = vector.shape_cast %6 : vector<8xf32> to vector<1x8xf32>
    %c0_9 = arith.constant 0 : index
    %c0_10 = arith.constant 0 : index
    %8 = vector.load %arg4[%c0_9, %c0_10] : memref<8x8xf32, #tpu.memory_space<vmem>>, vector<1x8xf32>
    tpu.vector_store %arg4[%c0_9, %c0_10], %7 {strides = array<i32>} : memref<8x8xf32, #tpu.memory_space<vmem>>, vector<1x8xf32>,
    %9 = arith.mulf %2, %2 : vector<1024x8xf32>
    %cst_11 = arith.constant dense<0.000000e+00> : vector<8xf32>
    %10 = vector.multi_reduction <add>, %9, %cst_11 [0] : vector<1024x8xf32> to vector<8xf32>
    %11 = vector.shape_cast %10 : vector<8xf32> to vector<1x8xf32>
    %c1 = arith.constant 1 : index
    %c0_12 = arith.constant 0 : index
    %12 = vector.load %arg4[%c1, %c0_12] : memref<8x8xf32, #tpu.memory_space<vmem>>, vector<1x8xf32>
    tpu.vector_store %arg4[%c1, %c0_12], %11 {strides = array<i32>} : memref<8x8xf32, #tpu.memory_space<vmem>>, vector<1x8xf32>,
    return
  }
  func.func @transform_0(%arg0: i32) -> (i32, i32) {
    %c0_i32 = arith.constant 0 : i32
    %c0_i32_0 = arith.constant 0 : i32
    return %arg0, %c0_i32 : i32, i32
  }
  func.func @transform_1(%arg0: i32) -> (i32, i32) {
    %c0_i32 = arith.constant 0 : i32
    %c0_i32_0 = arith.constant 0 : i32
    %c0_i32_1 = arith.constant 0 : i32
    return %c0_i32, %c0_i32_0 : i32, i32
  }
  func.func @transform_2(%arg0: i32) -> (i32, i32) {
    %c0_i32 = arith.constant 0 : i32
    %c0_i32_0 = arith.constant 0 : i32
    return %arg0, %c0_i32 : i32, i32
  }
  func.func @transform_3(%arg0: i32) -> (i32, i32) {
    %c0_i32 = arith.constant 0 : i32
    %c0_i32_0 = arith.constant 0 : i32
    return %arg0, %c0_i32 : i32, i32
  }
}

</mosaic_0001>

<llo_original>
// kernel: tpu_custom_call.1
$region0: #{tpu_custom_call.1}
  #allocation0 [shape = 'u32[]', space=smem, size = 0x4, offset = 0x4, fixed_abs, tag = 'smem constant byte address 0x4 - core index']
  #allocation1 [shape = 'u32[144,128]{1,0:T(1,128)}', space=vmem, size = 0x12000, scoped, tag = 'internal scratch']
  %s0 = inlined_call_operand.hbm [shape: bf16[1024,128], index: 0, kind: input, shape index: {}]
  %s1 = inlined_call_operand.vmem [shape: bf16[128,8], index: 1, kind: input, shape index: {}]
  %s2 = inlined_call_operand.vmem [shape: f32[1024,8], index: 2, kind: output, shape index: {0}]
  %s3 = inlined_call_operand.hbm [shape: f32[8,8], index: 3, kind: output, shape index: {1}]
  %4 = xla_tuple %s2, %s3
  %s5 = sld [smem:[#allocation0]]
  $region30: #{tpu_custom_call.1} parent=0
    _
  %s7 = ssub.s32 1, %s5
  %s8 = scalar_select 0, %s7, %s5
  $region1: #{tpu_custom_call.1} parent=0
    #allocation2 [shape = 'u8[262144]{0}', space=vmem, size = 0x40000, scoped, tag = 'input window, operand 0, single buffered']
    #allocation3 [shape = 's32[1]{0}', space=sflag, size = 0x4, scoped, tag = 'scoped memory for tpu_custom_call.1']
    #allocation4 [shape = 's32[1]{0}', space=sflag, size = 0x4, scoped, tag = 'scoped memory for tpu_custom_call.1']
    #allocation5 [shape = 'u8[4096]{0}', space=vmem, size = 0x1000, scoped, tag = 'output window, operand 1, single buffered']
    %9 = vsyncpa [#allocation3], 0
    %10 = vsyncpa [#allocation4], 0
    // Predicated region
    $region2: #{tpu_custom_call.1} parent=1 // pred_check
      _
    $region3: #{tpu_custom_call.1} parent=1 // pred_check_branch
      %12 = sbr.rel (0) target = $region5
    $region4: #{tpu_custom_call.1} parent=1 // pred_region
      %s14 = ssub.s32 8192, 8192
      %15 = vsyncadd [#allocation3], %s14
      %s16 = sshll.u32 [#allocation2], 4
      %s17 = int_to_ptr.vmem [resolvable:$true] %s16
      %22 = dma.hbm_to_vmem [thread:$0]  %s0, 8192, %s17, [#allocation3], 64, 64, 4
    $region5: #{tpu_custom_call.1} parent=1 // pred_fallthru
      _
    // Predicated region
    $region6: #{tpu_custom_call.1} parent=1 // pred_check
      _
    $region7: #{tpu_custom_call.1} parent=1 // pred_check_branch
      %24 = sbr.rel (0) target = $region9
    $region8: #{tpu_custom_call.1} parent=1 // pred_region
      _
    $region9: #{tpu_custom_call.1} parent=1 // pred_fallthru
      _
    // Predicated region
    $region10: #{tpu_custom_call.1} parent=1 // pred_check
      _
    $region11: #{tpu_custom_call.1} parent=1 // pred_check_branch
      %26 = sbr.rel (0) target = $region13
    $region12: #{tpu_custom_call.1} parent=1 // pred_region
      %27 = dma.done [#allocation3], 8192
    $region13: #{tpu_custom_call.1} parent=1 // pred_fallthru
      _
    %v29 = vld [vmem:[#allocation2] sm:$0xf]
    %v30 = vld [vmem:[#allocation2 + $0x4] sm:$0xf]
    %v31 = vld [vmem:[#allocation2 + $0x8] sm:$0xf]
    %v32 = vld [vmem:[#allocation2 + $0xc] sm:$0xf]
    %v33 = vld [vmem:[#allocation2 + $0x10] sm:$0xf]
    %v34 = vld [vmem:[#allocation2 + $0x14] sm:$0xf]
    %v35 = vld [vmem:[#allocation2 + $0x18] sm:$0xf]
    %v36 = vld [vmem:[#allocation2 + $0x1c] sm:$0xf]
    %v37 = vld [vmem:[#allocation2 + $0x20] sm:$0xf]
    %v38 = vld [vmem:[#allocation2 + $0x24] sm:$0xf]
    %v39 = vld [vmem:[#allocation2 + $0x28] sm:$0xf]
    %v40 = vld [vmem:[#allocation2 + $0x2c] sm:$0xf]
    %v41 = vld [vmem:[#allocation2 + $0x30] sm:$0xf]
    %v42 = vld [vmem:[#allocation2 + $0x34] sm:$0xf]
    %v43 = vld [vmem:[#allocation2 + $0x38] sm:$0xf]
    %v44 = vld [vmem:[#allocation2 + $0x3c] sm:$0xf]
    %v45 = vld [vmem:[#allocation2 + $0x40] sm:$0xf]
    %v46 = vld [vmem:[#allocation2 + $0x44] sm:$0xf]
    %v47 = vld [vmem:[#allocation2 + $0x48] sm:$0xf]
    %v48 = vld [vmem:[#allocation2 + $0x4c] sm:$0xf]
    %v49 = vld [vmem:[#allocation2 + $0x50] sm:$0xf]
    %v50 = vld [vmem:[#allocation2 + $0x54] sm:$0xf]
    %v51 = vld [vmem:[#allocation2 + $0x58] sm:$0xf]
    %v52 = vld [vmem:[#allocation2 + $0x5c] sm:$0xf]
    %v53 = vld [vmem:[#allocation2 + $0x60] sm:$0xf]
    %v54 = vld [vmem:[#allocation2 + $0x64] sm:$0xf]
    %v55 = vld [vmem:[#allocation2 + $0x68] sm:$0xf]
    %v56 = vld [vmem:[#allocation2 + $0x6c] sm:$0xf]
    %v57 = vld [vmem:[#allocation2 + $0x70] sm:$0xf]
    %v58 = vld [vmem:[#allocation2 + $0x74] sm:$0xf]
    %v59 = vld [vmem:[#allocation2 + $0x78] sm:$0xf]
    %v60 = vld [vmem:[#allocation2 + $0x7c] sm:$0xf]
    %v61 = vld [vmem:[#allocation2 + $0x80] sm:$0xf]
    %v62 = vld [vmem:[#allocation2 + $0x84] sm:$0xf]
    %v63 = vld [vmem:[#allocation2 + $0x88] sm:$0xf]
    %v64 = vld [vmem:[#allocation2 + $0x8c] sm:$0xf]
    %v65 = vld [vmem:[#allocation2 + $0x90] sm:$0xf]
    %v66 = vld [vmem:[#allocation2 + $0x94] sm:$0xf]
    %v67 = vld [vmem:[#allocation2 + $0x98] sm:$0xf]
    %v68 = vld [vmem:[#allocation2 + $0x9c] sm:$0xf]
    %v69 = vld [vmem:[#allocation2 + $0xa0] sm:$0xf]
    %v70 = vld [vmem:[#allocation2 + $0xa4] sm:$0xf]
    %v71 = vld [vmem:[#allocation2 + $0xa8] sm:$0xf]
    %v72 = vld [vmem:[#allocation2 + $0xac] sm:$0xf]
    %v73 = vld [vmem:[#allocation2 + $0xb0] sm:$0xf]
    %v74 = vld [vmem:[#allocation2 + $0xb4] sm:$0xf]
    %v75 = vld [vmem:[#allocation2 + $0xb8] sm:$0xf]
    %v76 = vld [vmem:[#allocation2 + $0xbc] sm:$0xf]
    %v77 = vld [vmem:[#allocation2 + $0xc0] sm:$0xf]
    %v78 = vld [vmem:[#allocation2 + $0xc4] sm:$0xf]
    %v79 = vld [vmem:[#allocation2 + $0xc8] sm:$0xf]
    %v80 = vld [vmem:[#allocation2 + $0xcc] sm:$0xf]
    %v81 = vld [vmem:[#allocation2 + $0xd0] sm:$0xf]
    %v82 = vld [vmem:[#allocation2 + $0xd4] sm:$0xf]
    %v83 = vld [vmem:[#allocation2 + $0xd8] sm:$0xf]
    %v84 = vld [vmem:[#allocation2 + $0xdc] sm:$0xf]
    %v85 = vld [vmem:[#allocation2 + $0xe0] sm:$0xf]
    %v86 = vld [vmem:[#allocation2 + $0xe4] sm:$0xf]
    %v87 = vld [vmem:[#allocation2 + $0xe8] sm:$0xf]
    %v88 = vld [vmem:[#allocation2 + $0xec] sm:$0xf]
    %v89 = vld [vmem:[#allocation2 + $0xf0] sm:$0xf]
    %v90 = vld [vmem:[#allocation2 + $0xf4] sm:$0xf]
    %v91 = vld [vmem:[#allocation2 + $0xf8] sm:$0xf]
    %v92 = vld [vmem:[#allocation2 + $0xfc] sm:$0xf]
    %v93 = vld [vmem:[#allocation2 + $0x100] sm:$0xf]
    %v94 = vld [vmem:[#allocation2 + $0x104] sm:$0xf]
    %v95 = vld [vmem:[#allocation2 + $0x108] sm:$0xf]
    %v96 = vld [vmem:[#allocation2 + $0x10c] sm:$0xf]
    %v97 = vld [vmem:[#allocation2 + $0x110] sm:$0xf]
    %v98 = vld [vmem:[#allocation2 + $0x114] sm:$0xf]
    %v99 = vld [vmem:[#allocation2 + $0x118] sm:$0xf]
    %v100 = vld [vmem:[#allocation2 + $0x11c] sm:$0xf]
    %v101 = vld [vmem:[#allocation2 + $0x120] sm:$0xf]
    %v102 = vld [vmem:[#allocation2 + $0x124] sm:$0xf]
    %v103 = vld [vmem:[#allocation2 + $0x128] sm:$0xf]
    %v104 = vld [vmem:[#allocation2 + $0x12c] sm:$0xf]
    %v105 = vld [vmem:[#allocation2 + $0x130] sm:$0xf]
    %v106 = vld [vmem:[#allocation2 + $0x134] sm:$0xf]
    %v107 = vld [vmem:[#allocation2 + $0x138] sm:$0xf]
    %v108 = vld [vmem:[#allocation2 + $0x13c] sm:$0xf]
    %v109 = vld [vmem:[#allocation2 + $0x140] sm:$0xf]
    %v110 = vld [vmem:[#allocation2 + $0x144] sm:$0xf]
    %v111 = vld [vmem:[#allocation2 + $0x148] sm:$0xf]
    %v112 = vld [vmem:[#allocation2 + $0x14c] sm:$0xf]
    %v113 = vld [vmem:[#allocation2 + $0x150] sm:$0xf]
    %v114 = vld [vmem:[#allocation2 + $0x154] sm:$0xf]
    %v115 = vld [vmem:[#allocation2 + $0x158] sm:$0xf]
    %v116 = vld [vmem:[#allocation2 + $0x15c] sm:$0xf]
    %v117 = vld [vmem:[#allocation2 + $0x160] sm:$0xf]
    %v118 = vld [vmem:[#allocation2 + $0x164] sm:$0xf]
    %v119 = vld [vmem:[#allocation2 + $0x168] sm:$0xf]
    %v120 = vld [vmem:[#allocation2 + $0x16c] sm:$0xf]
    %v121 = vld [vmem:[#allocation2 + $0x170] sm:$0xf]
    %v122 = vld [vmem:[#allocation2 + $0x174] sm:$0xf]
    %v123 = vld [vmem:[#allocation2 + $0x178] sm:$0xf]
    %v124 = vld [vmem:[#allocation2 + $0x17c] sm:$0xf]
    %v125 = vld [vmem:[#allocation2 + $0x180] sm:$0xf]
    %v126 = vld [vmem:[#allocation2 + $0x184] sm:$0xf]
    %v127 = vld [vmem:[#allocation2 + $0x188] sm:$0xf]
    %v128 = vld [vmem:[#allocation2 + $0x18c] sm:$0xf]
    %v129 = vld [vmem:[#allocation2 + $0x190] sm:$0xf]
    %v130 = vld [vmem:[#allocation2 + $0x194] sm:$0xf]
    %v131 = vld [vmem:[#allocation2 + $0x198] sm:$0xf]
    %v132 = vld [vmem:[#allocation2 + $0x19c] sm:$0xf]
    %v133 = vld [vmem:[#allocation2 + $0x1a0] sm:$0xf]
    %v134 = vld [vmem:[#allocation2 + $0x1a4] sm:$0xf]
    %v135 = vld [vmem:[#allocation2 + $0x1a8] sm:$0xf]
    %v136 = vld [vmem:[#allocation2 + $0x1ac] sm:$0xf]
    %v137 = vld [vmem:[#allocation2 + $0x1b0] sm:$0xf]
    %v138 = vld [vmem:[#allocation2 + $0x1b4] sm:$0xf]
    %v139 = vld [vmem:[#allocation2 + $0x1b8] sm:$0xf]
    %v140 = vld [vmem:[#allocation2 + $0x1bc] sm:$0xf]
    %v141 = vld [vmem:[#allocation2 + $0x1c0] sm:$0xf]
    %v142 = vld [vmem:[#allocation2 + $0x1c4] sm:$0xf]
    %v143 = vld [vmem:[#allocation2 + $0x1c8] sm:$0xf]
    %v144 = vld [vmem:[#allocation2 + $0x1cc] sm:$0xf]
    %v145 = vld [vmem:[#allocation2 + $0x1d0] sm:$0xf]
    %v146 = vld [vmem:[#allocation2 + $0x1d4] sm:$0xf]
    %v147 = vld [vmem:[#allocation2 + $0x1d8] sm:$0xf]
    %v148 = vld [vmem:[#allocation2 + $0x1dc] sm:$0xf]
    %v149 = vld [vmem:[#allocation2 + $0x1e0] sm:$0xf]
    %v150 = vld [vmem:[#allocation2 + $0x1e4] sm:$0xf]
    %v151 = vld [vmem:[#allocation2 + $0x1e8] sm:$0xf]
    %v152 = vld [vmem:[#allocation2 + $0x1ec] sm:$0xf]
    %v153 = vld [vmem:[#allocation2 + $0x1f0] sm:$0xf]
    %v154 = vld [vmem:[#allocation2 + $0x1f4] sm:$0xf]
    %v155 = vld [vmem:[#allocation2 + $0x1f8] sm:$0xf]
    %v156 = vld [vmem:[#allocation2 + $0x1fc] sm:$0xf]
    %v157 = vld [vmem:[%s1] sm:$0xf]
    %v158 = vld [vmem:[%s1 + $0x4] sm:$0xf]
    %v159 = vld [vmem:[%s1 + $0x8] sm:$0xf]
    %v160 = vld [vmem:[%s1 + $0xc] sm:$0xf]
    %v161 = vld [vmem:[%s1 + $0x10] sm:$0xf]
    %v162 = vld [vmem:[%s1 + $0x14] sm:$0xf]
    %v163 = vld [vmem:[%s1 + $0x18] sm:$0xf]
    %v164 = vld [vmem:[%s1 + $0x1c] sm:$0xf]
    %v165 = vld [vmem:[%s1 + $0x20] sm:$0xf]
    %v166 = vld [vmem:[%s1 + $0x24] sm:$0xf]
    %v167 = vld [vmem:[%s1 + $0x28] sm:$0xf]
    %v168 = vld [vmem:[%s1 + $0x2c] sm:$0xf]
    %v169 = vld [vmem:[%s1 + $0x30] sm:$0xf]
    %v170 = vld [vmem:[%s1 + $0x34] sm:$0xf]
    %v171 = vld [vmem:[%s1 + $0x38] sm:$0xf]
    %v172 = vld [vmem:[%s1 + $0x3c] sm:$0xf]
    %v301 = vunpack.c.l.b16 %v29
    %v302 = vunpack.c.l.b16 %v30
    %v303 = vunpack.c.l.b16 %v31
    %v304 = vunpack.c.l.b16 %v32
    %v305 = vunpack.c.l.b16 %v33
    %v306 = vunpack.c.l.b16 %v34
    %v307 = vunpack.c.l.b16 %v35
    %v308 = vunpack.c.l.b16 %v36
    %v309 = vunpack.c.l.b16 %v37
    %v310 = vunpack.c.l.b16 %v38
    %v311 = vunpack.c.l.b16 %v39
    %v312 = vunpack.c.l.b16 %v40
    %v313 = vunpack.c.l.b16 %v41
    %v314 = vunpack.c.l.b16 %v42
    %v315 = vunpack.c.l.b16 %v43
    %v316 = vunpack.c.l.b16 %v44
    %v317 = vunpack.c.l.b16 %v45
    %v318 = vunpack.c.l.b16 %v46
    %v319 = vunpack.c.l.b16 %v47
    %v320 = vunpack.c.l.b16 %v48
    %v321 = vunpack.c.l.b16 %v49
    %v322 = vunpack.c.l.b16 %v50
    %v323 = vunpack.c.l.b16 %v51
    %v324 = vunpack.c.l.b16 %v52
    %v325 = vunpack.c.l.b16 %v53
    %v326 = vunpack.c.l.b16 %v54
    %v327 = vunpack.c.l.b16 %v55
    %v328 = vunpack.c.l.b16 %v56
    %v329 = vunpack.c.l.b16 %v57
    %v330 = vunpack.c.l.b16 %v58
    %v331 = vunpack.c.l.b16 %v59
    %v332 = vunpack.c.l.b16 %v60
    %v333 = vunpack.c.l.b16 %v61
    %v334 = vunpack.c.l.b16 %v62
    %v335 = vunpack.c.l.b16 %v63
    %v336 = vunpack.c.l.b16 %v64
    %v337 = vunpack.c.l.b16 %v65
    %v338 = vunpack.c.l.b16 %v66
    %v339 = vunpack.c.l.b16 %v67
    %v340 = vunpack.c.l.b16 %v68
    %v341 = vunpack.c.l.b16 %v69
    %v342 = vunpack.c.l.b16 %v70
    %v343 = vunpack.c.l.b16 %v71
    %v344 = vunpack.c.l.b16 %v72
    %v345 = vunpack.c.l.b16 %v73
    %v346 = vunpack.c.l.b16 %v74
    %v347 = vunpack.c.l.b16 %v75
    %v348 = vunpack.c.l.b16 %v76
    %v349 = vunpack.c.l.b16 %v77
    %v350 = vunpack.c.l.b16 %v78
    %v351 = vunpack.c.l.b16 %v79
    %v352 = vunpack.c.l.b16 %v80
    %v353 = vunpack.c.l.b16 %v81
    %v354 = vunpack.c.l.b16 %v82
    %v355 = vunpack.c.l.b16 %v83
    %v356 = vunpack.c.l.b16 %v84
    %v357 = vunpack.c.l.b16 %v85
    %v358 = vunpack.c.l.b16 %v86
    %v359 = vunpack.c.l.b16 %v87
    %v360 = vunpack.c.l.b16 %v88
    %v361 = vunpack.c.l.b16 %v89
    %v362 = vunpack.c.l.b16 %v90
    %v363 = vunpack.c.l.b16 %v91
    %v364 = vunpack.c.l.b16 %v92
    %v365 = vunpack.c.l.b16 %v93
    %v366 = vunpack.c.l.b16 %v94
    %v367 = vunpack.c.l.b16 %v95
    %v368 = vunpack.c.l.b16 %v96
    %v369 = vunpack.c.l.b16 %v97
    %v370 = vunpack.c.l.b16 %v98
    %v371 = vunpack.c.l.b16 %v99
    %v372 = vunpack.c.l.b16 %v100
    %v373 = vunpack.c.l.b16 %v101
    %v374 = vunpack.c.l.b16 %v102
    %v375 = vunpack.c.l.b16 %v103
    %v376 = vunpack.c.l.b16 %v104
    %v377 = vunpack.c.l.b16 %v105
    %v378 = vunpack.c.l.b16 %v106
    %v379 = vunpack.c.l.b16 %v107
    %v380 = vunpack.c.l.b16 %v108
    %v381 = vunpack.c.l.b16 %v109
    %v382 = vunpack.c.l.b16 %v110
    %v383 = vunpack.c.l.b16 %v111
    %v384 = vunpack.c.l.b16 %v112
    %v385 = vunpack.c.l.b16 %v113
    %v386 = vunpack.c.l.b16 %v114
    %v387 = vunpack.c.l.b16 %v115
    %v388 = vunpack.c.l.b16 %v116
    %v389 = vunpack.c.l.b16 %v117
    %v390 = vunpack.c.l.b16 %v118
    %v391 = vunpack.c.l.b16 %v119
    %v392 = vunpack.c.l.b16 %v120
    %v393 = vunpack.c.l.b16 %v121
    %v394 = vunpack.c.l.b16 %v122
    %v395 = vunpack.c.l.b16 %v123
    %v396 = vunpack.c.l.b16 %v124
    %v397 = vunpack.c.l.b16 %v125
    %v398 = vunpack.c.l.b16 %v126
    %v399 = vunpack.c.l.b16 %v127
    %v400 = vunpack.c.l.b16 %v128
    %v401 = vunpack.c.l.b16 %v129
    %v402 = vunpack.c.l.b16 %v130
    %v403 = vunpack.c.l.b16 %v131
    %v404 = vunpack.c.l.b16 %v132
    %v405 = vunpack.c.l.b16 %v133
    %v406 = vunpack.c.l.b16 %v134
    %v407 = vunpack.c.l.b16 %v135
    %v408 = vunpack.c.l.b16 %v136
    %v409 = vunpack.c.l.b16 %v137
    %v410 = vunpack.c.l.b16 %v138
    %v411 = vunpack.c.l.b16 %v139
    %v412 = vunpack.c.l.b16 %v140
    %v413 = vunpack.c.l.b16 %v141
    %v414 = vunpack.c.l.b16 %v142
    %v415 = vunpack.c.l.b16 %v143
    %v416 = vunpack.c.l.b16 %v144
    %v417 = vunpack.c.l.b16 %v145
    %v418 = vunpack.c.l.b16 %v146
    %v419 = vunpack.c.l.b16 %v147
    %v420 = vunpack.c.l.b16 %v148
    %v421 = vunpack.c.l.b16 %v149
    %v422 = vunpack.c.l.b16 %v150
    %v423 = vunpack.c.l.b16 %v151
    %v424 = vunpack.c.l.b16 %v152
    %v425 = vunpack.c.l.b16 %v153
    %v426 = vunpack.c.l.b16 %v154
    %v427 = vunpack.c.l.b16 %v155
    %v428 = vunpack.c.l.b16 %v156
    %v429 = vpack.c.b16 %v302, %v301
    %v430 = vpack.c.b16 %v304, %v303
    %v431 = vpack.c.b16 %v306, %v305
    %v432 = vpack.c.b16 %v308, %v307
    %v433 = vpack.c.b16 %v310, %v309
    %v434 = vpack.c.b16 %v312, %v311
    %v435 = vpack.c.b16 %v314, %v313
    %v436 = vpack.c.b16 %v316, %v315
    %v437 = vpack.c.b16 %v318, %v317
    %v438 = vpack.c.b16 %v320, %v319
    %v439 = vpack.c.b16 %v322, %v321
    %v440 = vpack.c.b16 %v324, %v323
    %v441 = vpack.c.b16 %v326, %v325
    %v442 = vpack.c.b16 %v328, %v327
    %v443 = vpack.c.b16 %v330, %v329
    %v444 = vpack.c.b16 %v332, %v331
    %v445 = vpack.c.b16 %v334, %v333
    %v446 = vpack.c.b16 %v336, %v335
    %v447 = vpack.c.b16 %v338, %v337
    %v448 = vpack.c.b16 %v340, %v339
    %v449 = vpack.c.b16 %v342, %v341
    %v450 = vpack.c.b16 %v344, %v343
    %v451 = vpack.c.b16 %v346, %v345
    %v452 = vpack.c.b16 %v348, %v347
    %v453 = vpack.c.b16 %v350, %v349
    %v454 = vpack.c.b16 %v352, %v351
    %v455 = vpack.c.b16 %v354, %v353
    %v456 = vpack.c.b16 %v356, %v355
    %v457 = vpack.c.b16 %v358, %v357
    %v458 = vpack.c.b16 %v360, %v359
    %v459 = vpack.c.b16 %v362, %v361
    %v460 = vpack.c.b16 %v364, %v363
    %v461 = vpack.c.b16 %v366, %v365
    %v462 = vpack.c.b16 %v368, %v367
    %v463 = vpack.c.b16 %v370, %v369
    %v464 = vpack.c.b16 %v372, %v371
    %v465 = vpack.c.b16 %v374, %v373
    %v466 = vpack.c.b16 %v376, %v375
    %v467 = vpack.c.b16 %v378, %v377
    %v468 = vpack.c.b16 %v380, %v379
    %v469 = vpack.c.b16 %v382, %v381
    %v470 = vpack.c.b16 %v384, %v383
    %v471 = vpack.c.b16 %v386, %v385
    %v472 = vpack.c.b16 %v388, %v387
    %v473 = vpack.c.b16 %v390, %v389
    %v474 = vpack.c.b16 %v392, %v391
    %v475 = vpack.c.b16 %v394, %v393
    %v476 = vpack.c.b16 %v396, %v395
    %v477 = vpack.c.b16 %v398, %v397
    %v478 = vpack.c.b16 %v400, %v399
    %v479 = vpack.c.b16 %v402, %v401
    %v480 = vpack.c.b16 %v404, %v403
    %v481 = vpack.c.b16 %v406, %v405
    %v482 = vpack.c.b16 %v408, %v407
    %v483 = vpack.c.b16 %v410, %v409
    %v484 = vpack.c.b16 %v412, %v411
    %v485 = vpack.c.b16 %v414, %v413
    %v486 = vpack.c.b16 %v416, %v415
    %v487 = vpack.c.b16 %v418, %v417
    %v488 = vpack.c.b16 %v420, %v419
    %v489 = vpack.c.b16 %v422, %v421
    %v490 = vpack.c.b16 %v424, %v423
    %v491 = vpack.c.b16 %v426, %v425
    %v492 = vpack.c.b16 %v428, %v427
    %v573 = vunpack.c.l.b16 %v157
    %v574 = vunpack.c.l.b16 %v158
    %v575 = vunpack.c.l.b16 %v159
    %v576 = vunpack.c.l.b16 %v160
    %v577 = vunpack.c.l.b16 %v161
    %v578 = vunpack.c.l.b16 %v162
    %v579 = vunpack.c.l.b16 %v163
    %v580 = vunpack.c.l.b16 %v164
    %v581 = vunpack.c.l.b16 %v165
    %v582 = vunpack.c.l.b16 %v166
    %v583 = vunpack.c.l.b16 %v167
    %v584 = vunpack.c.l.b16 %v168
    %v585 = vunpack.c.l.b16 %v169
    %v586 = vunpack.c.l.b16 %v170
    %v587 = vunpack.c.l.b16 %v171
    %v588 = vunpack.c.l.b16 %v172
    %v589 = vpack.c.b16 %v574, %v573
    %v590 = vpack.c.b16 %v576, %v575
    %v591 = vpack.c.b16 %v578, %v577
    %v592 = vpack.c.b16 %v580, %v579
    %v593 = vpack.c.b16 %v582, %v581
    %v594 = vpack.c.b16 %v584, %v583
    %v595 = vpack.c.b16 %v586, %v585
    %v596 = vpack.c.b16 %v588, %v587
    %605 = vmatprep.subr.bf16.mxu0 0
    %606 = vmatpush1.bf16.msra.mxu0 %v589
    %607 = vmatprep.subr.bf16.mxu0 0
    %608 = vmatpush1.bf16.msra.mxu0 %v590
    %609 = vmatprep.subr.bf16.mxu0 0
    %610 = vmatpush1.bf16.msra.mxu0 %v591
    %611 = vmatprep.subr.bf16.mxu0 0
    %612 = vmatpush1.bf16.msra.mxu0 %v592
    %613 = vmatprep.subr.bf16.mxu0 0
    %614 = vmatpush1.bf16.msra.mxu0 %v593
    %615 = vmatprep.subr.bf16.mxu0 0
    %616 = vmatpush1.bf16.msra.mxu0 %v594
    %617 = vmatprep.subr.bf16.mxu0 0
    %618 = vmatpush1.bf16.msra.mxu0 %v595
    %619 = vmatprep.subr.bf16.mxu0 0
    %620 = vmatpush1.bf16.msra.mxu0 %v596
    %621 = vmatprep.subr.bf16.mxu0 0
    %622 = vmatpush1.bf16.msra.mxu0 0
    %623 = vmatprep.subr.bf16.mxu0 0
    %624 = vmatpush1.bf16.msra.mxu0 0
    %625 = vmatprep.subr.bf16.mxu0 0
    %626 = vmatpush1.bf16.msra.mxu0 0
    %627 = vmatprep.subr.bf16.mxu0 0
    %628 = vmatpush1.bf16.msra.mxu0 0
    %629 = vmatprep.subr.bf16.mxu0 0
    %630 = vmatpush1.bf16.msra.mxu0 0
    %631 = vmatprep.subr.bf16.mxu0 0
    %632 = vmatpush1.bf16.msra.mxu0 0
    %633 = vmatprep.subr.bf16.mxu0 0
    %634 = vmatpush1.bf16.msra.mxu0 0
    %635 = vmatprep.subr.bf16.mxu0 0
    %636 = vmatpush1.bf16.msra.mxu0 0
    %637 = vmatprep.mubr.bf16.mxu0 0
    %638 = vmatmul.mubr.bf16.gmra.mrb[0].mxu0 %v429
    %v639 = vpop.f32.mrb[0].mxu0
    %v640 = vadd.f32 0.0, %v639
    %v641 = vpop.f32.mrb[0].mxu0
    %v642 = vpop.f32.mrb[0].mxu0
    %v643 = vadd.f32 0.0, %v642
    %v644 = vpop.f32.mrb[0].mxu0
    %645 = vmatprep.mubr.bf16.mxu0 0
    %646 = vmatmul.mubr.bf16.gmra.mrb[0].mxu0 %v430
    %v647 = vpop.f32.mrb[0].mxu0
    %v648 = vadd.f32 0.0, %v647
    %v649 = vpop.f32.mrb[0].mxu0
    %v650 = vpop.f32.mrb[0].mxu0
    %v651 = vadd.f32 0.0, %v650
    %v652 = vpop.f32.mrb[0].mxu0
    %653 = vmatprep.mubr.bf16.mxu0 0
    %654 = vmatmul.mubr.bf16.gmra.mrb[0].mxu0 %v431
    %v655 = vpop.f32.mrb[0].mxu0
    %v656 = vadd.f32 0.0, %v655
    %v657 = vpop.f32.mrb[0].mxu0
    %v658 = vpop.f32.mrb[0].mxu0
    %v659 = vadd.f32 0.0, %v658
    %v660 = vpop.f32.mrb[0].mxu0
    %661 = vmatprep.mubr.bf16.mxu0 0
    %662 = vmatmul.mubr.bf16.gmra.mrb[0].mxu0 %v432
    %v663 = vpop.f32.mrb[0].mxu0
    %v664 = vadd.f32 0.0, %v663
    %v665 = vpop.f32.mrb[0].mxu0
    %v666 = vpop.f32.mrb[0].mxu0
    %v667 = vadd.f32 0.0, %v666
    %v668 = vpop.f32.mrb[0].mxu0
    %669 = vmatprep.mubr.bf16.mxu0 0
    %670 = vmatmul.mubr.bf16.gmra.mrb[0].mxu0 %v433
    %v671 = vpop.f32.mrb[0].mxu0
    %v672 = vadd.f32 0.0, %v671
    %v673 = vpop.f32.mrb[0].mxu0
    %v674 = vpop.f32.mrb[0].mxu0
    %v675 = vadd.f32 0.0, %v674
    %v676 = vpop.f32.mrb[0].mxu0
    %677 = vmatprep.mubr.bf16.mxu0 0
    %678 = vmatmul.mubr.bf16.gmra.mrb[0].mxu0 %v434
    %v679 = vpop.f32.mrb[0].mxu0
    %v680 = vadd.f32 0.0, %v679
    %v681 = vpop.f32.mrb[0].mxu0
    %v682 = vpop.f32.mrb[0].mxu0
    %v683 = vadd.f32 0.0, %v682
    %v684 = vpop.f32.mrb[0].mxu0
    %685 = vmatprep.mubr.bf16.mxu0 0
    %686 = vmatmul.mubr.bf16.gmra.mrb[0].mxu0 %v435
    %v687 = vpop.f32.mrb[0].mxu0
    %v688 = vadd.f32 0.0, %v687
    %v689 = vpop.f32.mrb[0].mxu0
    %v690 = vpop.f32.mrb[0].mxu0
    %v691 = vadd.f32 0.0, %v690
    %v692 = vpop.f32.mrb[0].mxu0
    %693 = vmatprep.mubr.bf16.mxu0 0
    %694 = vmatmul.mubr.bf16.gmra.mrb[0].mxu0 %v436
    %v695 = vpop.f32.mrb[0].mxu0
    %v696 = vadd.f32 0.0, %v695
    %v697 = vpop.f32.mrb[0].mxu0
    %v698 = vpop.f32.mrb[0].mxu0
    %v699 = vadd.f32 0.0, %v698
    %v700 = vpop.f32.mrb[0].mxu0
    %701 = vmatprep.mubr.bf16.mxu0 0
    %702 = vmatmul.mubr.bf16.gmra.mrb[0].mxu0 %v437
    %v703 = vpop.f32.mrb[0].mxu0
    %v704 = vadd.f32 0.0, %v703
    %v705 = vpop.f32.mrb[0].mxu0
    %v706 = vpop.f32.mrb[0].mxu0
    %v707 = vadd.f32 0.0, %v706
    %v708 = vpop.f32.mrb[0].mxu0
    %709 = vmatprep.mubr.bf16.mxu0 0
    %710 = vmatmul.mubr.bf16.gmra.mrb[0].mxu0 %v438
    %v711 = vpop.f32.mrb[0].mxu0
    %v712 = vadd.f32 0.0, %v711
    %v713 = vpop.f32.mrb[0].mxu0
    %v714 = vpop.f32.mrb[0].mxu0
    %v715 = vadd.f32 0.0, %v714
    %v716 = vpop.f32.mrb[0].mxu0
    %717 = vmatprep.mubr.bf16.mxu0 0
    %718 = vmatmul.mubr.bf16.gmra.mrb[0].mxu0 %v439
    %v719 = vpop.f32.mrb[0].mxu0
    %v720 = vadd.f32 0.0, %v719
    %v721 = vpop.f32.mrb[0].mxu0
    %v722 = vpop.f32.mrb[0].mxu0
    %v723 = vadd.f32 0.0, %v722
    %v724 = vpop.f32.mrb[0].mxu0
    %725 = vmatprep.mubr.bf16.mxu0 0
    %726 = vmatmul.mubr.bf16.gmra.mrb[0].mxu0 %v440
    %v727 = vpop.f32.mrb[0].mxu0
    %v728 = vadd.f32 0.0, %v727
    %v729 = vpop.f32.mrb[0].mxu0
    %v730 = vpop.f32.mrb[0].mxu0
    %v731 = vadd.f32 0.0, %v730
    %v732 = vpop.f32.mrb[0].mxu0
    %733 = vmatprep.mubr.bf16.mxu0 0
    %734 = vmatmul.mubr.bf16.gmra.mrb[0].mxu0 %v441
    %v735 = vpop.f32.mrb[0].mxu0
    %v736 = vadd.f32 0.0, %v735
    %v737 = vpop.f32.mrb[0].mxu0
    %v738 = vpop.f32.mrb[0].mxu0
    %v739 = vadd.f32 0.0, %v738
    %v740 = vpop.f32.mrb[0].mxu0
    %741 = vmatprep.mubr.bf16.mxu0 0
    %742 = vmatmul.mubr.bf16.gmra.mrb[0].mxu0 %v442
    %v743 = vpop.f32.mrb[0].mxu0
    %v744 = vadd.f32 0.0, %v743
    %v745 = vpop.f32.mrb[0].mxu0
    %v746 = vpop.f32.mrb[0].mxu0
    %v747 = vadd.f32 0.0, %v746
    %v748 = vpop.f32.mrb[0].mxu0
    %749 = vmatprep.mubr.bf16.mxu0 0
    %750 = vmatmul.mubr.bf16.gmra.mrb[0].mxu0 %v443
    %v751 = vpop.f32.mrb[0].mxu0
    %v752 = vadd.f32 0.0, %v751
    %v753 = vpop.f32.mrb[0].mxu0
    %v754 = vpop.f32.mrb[0].mxu0
    %v755 = vadd.f32 0.0, %v754
    %v756 = vpop.f32.mrb[0].mxu0
    %757 = vmatprep.mubr.bf16.mxu0 0
    %758 = vmatmul.mubr.bf16.gmra.mrb[0].mxu0 %v444
    %v759 = vpop.f32.mrb[0].mxu0
    %v760 = vadd.f32 0.0, %v759
    %v761 = vpop.f32.mrb[0].mxu0
    %v762 = vpop.f32.mrb[0].mxu0
    %v763 = vadd.f32 0.0, %v762
    %v764 = vpop.f32.mrb[0].mxu0
    %765 = vmatprep.mubr.bf16.mxu0 0
    %766 = vmatmul.mubr.bf16.gmra.mrb[0].mxu0 %v445
    %v767 = vpop.f32.mrb[0].mxu0
    %v768 = vadd.f32 0.0, %v767
    %v769 = vpop.f32.mrb[0].mxu0
    %v770 = vpop.f32.mrb[0].mxu0
    %v771 = vadd.f32 0.0, %v770
    %v772 = vpop.f32.mrb[0].mxu0
    %773 = vmatprep.mubr.bf16.mxu0 0
    %774 = vmatmul.mubr.bf16.gmra.mrb[0].mxu0 %v446
    %v775 = vpop.f32.mrb[0].mxu0
    %v776 = vadd.f32 0.0, %v775
    %v777 = vpop.f32.mrb[0].mxu0
    %v778 = vpop.f32.mrb[0].mxu0
    %v779 = vadd.f32 0.0, %v778
    %v780 = vpop.f32.mrb[0].mxu0
    %781 = vmatprep.mubr.bf16.mxu0 0
    %782 = vmatmul.mubr.bf16.gmra.mrb[0].mxu0 %v447
    %v783 = vpop.f32.mrb[0].mxu0
    %v784 = vadd.f32 0.0, %v783
    %v785 = vpop.f32.mrb[0].mxu0
    %v786 = vpop.f32.mrb[0].mxu0
    %v787 = vadd.f32 0.0, %v786
    %v788 = vpop.f32.mrb[0].mxu0
    %789 = vmatprep.mubr.bf16.mxu0 0
    %790 = vmatmul.mubr.bf16.gmra.mrb[0].mxu0 %v448
    %v791 = vpop.f32.mrb[0].mxu0
    %v792 = vadd.f32 0.0, %v791
    %v793 = vpop.f32.mrb[0].mxu0
    %v794 = vpop.f32.mrb[0].mxu0
    %v795 = vadd.f32 0.0, %v794
    %v796 = vpop.f32.mrb[0].mxu0
    %797 = vmatprep.mubr.bf16.mxu0 0
    %798 = vmatmul.mubr.bf16.gmra.mrb[0].mxu0 %v449
    %v799 = vpop.f32.mrb[0].mxu0
    %v800 = vadd.f32 0.0, %v799
    %v801 = vpop.f32.mrb[0].mxu0
    %v802 = vpop.f32.mrb[0].mxu0
    %v803 = vadd.f32 0.0, %v802
    %v804 = vpop.f32.mrb[0].mxu0
    %805 = vmatprep.mubr.bf16.mxu0 0
    %806 = vmatmul.mubr.bf16.gmra.mrb[0].mxu0 %v450
    %v807 = vpop.f32.mrb[0].mxu0
    %v808 = vadd.f32 0.0, %v807
    %v809 = vpop.f32.mrb[0].mxu0
    %v810 = vpop.f32.mrb[0].mxu0
    %v811 = vadd.f32 0.0, %v810
    %v812 = vpop.f32.mrb[0].mxu0
    %813 = vmatprep.mubr.bf16.mxu0 0
    %814 = vmatmul.mubr.bf16.gmra.mrb[0].mxu0 %v451
    %v815 = vpop.f32.mrb[0].mxu0
    %v816 = vadd.f32 0.0, %v815
    %v817 = vpop.f32.mrb[0].mxu0
    %v818 = vpop.f32.mrb[0].mxu0
    %v819 = vadd.f32 0.0, %v818
    %v820 = vpop.f32.mrb[0].mxu0
    %821 = vmatprep.mubr.bf16.mxu0 0
    %822 = vmatmul.mubr.bf16.gmra.mrb[0].mxu0 %v452
    %v823 = vpop.f32.mrb[0].mxu0
    %v824 = vadd.f32 0.0, %v823
    %v825 = vpop.f32.mrb[0].mxu0
    %v826 = vpop.f32.mrb[0].mxu0
    %v827 = vadd.f32 0.0, %v826
    %v828 = vpop.f32.mrb[0].mxu0
    %829 = vmatprep.mubr.bf16.mxu0 0
    %830 = vmatmul.mubr.bf16.gmra.mrb[0].mxu0 %v453
    %v831 = vpop.f32.mrb[0].mxu0
    %v832 = vadd.f32 0.0, %v831
    %v833 = vpop.f32.mrb[0].mxu0
    %v834 = vpop.f32.mrb[0].mxu0
    %v835 = vadd.f32 0.0, %v834
    %v836 = vpop.f32.mrb[0].mxu0
    %837 = vmatprep.mubr.bf16.mxu0 0
    %838 = vmatmul.mubr.bf16.gmra.mrb[0].mxu0 %v454
    %v839 = vpop.f32.mrb[0].mxu0
    %v840 = vadd.f32 0.0, %v839
    %v841 = vpop.f32.mrb[0].mxu0
    %v842 = vpop.f32.mrb[0].mxu0
    %v843 = vadd.f32 0.0, %v842
    %v844 = vpop.f32.mrb[0].mxu0
    %845 = vmatprep.mubr.bf16.mxu0 0
    %846 = vmatmul.mubr.bf16.gmra.mrb[0].mxu0 %v455
    %v847 = vpop.f32.mrb[0].mxu0
    %v848 = vadd.f32 0.0, %v847
    %v849 = vpop.f32.mrb[0].mxu0
    %v850 = vpop.f32.mrb[0].mxu0
    %v851 = vadd.f32 0.0, %v850
    %v852 = vpop.f32.mrb[0].mxu0
    %853 = vmatprep.mubr.bf16.mxu0 0
    %854 = vmatmul.mubr.bf16.gmra.mrb[0].mxu0 %v456
    %v855 = vpop.f32.mrb[0].mxu0
    %v856 = vadd.f32 0.0, %v855
    %v857 = vpop.f32.mrb[0].mxu0
    %v858 = vpop.f32.mrb[0].mxu0
    %v859 = vadd.f32 0.0, %v858
    %v860 = vpop.f32.mrb[0].mxu0
    %861 = vmatprep.mubr.bf16.mxu0 0
    %862 = vmatmul.mubr.bf16.gmra.mrb[0].mxu0 %v457
    %v863 = vpop.f32.mrb[0].mxu0
    %v864 = vadd.f32 0.0, %v863
    %v865 = vpop.f32.mrb[0].mxu0
    %v866 = vpop.f32.mrb[0].mxu0
    %v867 = vadd.f32 0.0, %v866
    %v868 = vpop.f32.mrb[0].mxu0
    %869 = vmatprep.mubr.bf16.mxu0 0
    %870 = vmatmul.mubr.bf16.gmra.mrb[0].mxu0 %v458
    %v871 = vpop.f32.mrb[0].mxu0
    %v872 = vadd.f32 0.0, %v871
    %v873 = vpop.f32.mrb[0].mxu0
    %v874 = vpop.f32.mrb[0].mxu0
    %v875 = vadd.f32 0.0, %v874
    %v876 = vpop.f32.mrb[0].mxu0
    %877 = vmatprep.mubr.bf16.mxu0 0
    %878 = vmatmul.mubr.bf16.gmra.mrb[0].mxu0 %v459
    %v879 = vpop.f32.mrb[0].mxu0
    %v880 = vadd.f32 0.0, %v879
    %v881 = vpop.f32.mrb[0].mxu0
    %v882 = vpop.f32.mrb[0].mxu0
    %v883 = vadd.f32 0.0, %v882
    %v884 = vpop.f32.mrb[0].mxu0
    %885 = vmatprep.mubr.bf16.mxu0 0
    %886 = vmatmul.mubr.bf16.gmra.mrb[0].mxu0 %v460
    %v887 = vpop.f32.mrb[0].mxu0
    %v888 = vadd.f32 0.0, %v887
    %v889 = vpop.f32.mrb[0].mxu0
    %v890 = vpop.f32.mrb[0].mxu0
    %v891 = vadd.f32 0.0, %v890
    %v892 = vpop.f32.mrb[0].mxu0
    %893 = vmatprep.mubr.bf16.mxu0 0
    %894 = vmatmul.mubr.bf16.gmra.mrb[0].mxu0 %v461
    %v895 = vpop.f32.mrb[0].mxu0
    %v896 = vadd.f32 0.0, %v895
    %v897 = vpop.f32.mrb[0].mxu0
    %v898 = vpop.f32.mrb[0].mxu0
    %v899 = vadd.f32 0.0, %v898
    %v900 = vpop.f32.mrb[0].mxu0
    %901 = vmatprep.mubr.bf16.mxu0 0
    %902 = vmatmul.mubr.bf16.gmra.mrb[0].mxu0 %v462
    %v903 = vpop.f32.mrb[0].mxu0
    %v904 = vadd.f32 0.0, %v903
    %v905 = vpop.f32.mrb[0].mxu0
    %v906 = vpop.f32.mrb[0].mxu0
    %v907 = vadd.f32 0.0, %v906
    %v908 = vpop.f32.mrb[0].mxu0
    %909 = vmatprep.mubr.bf16.mxu0 0
    %910 = vmatmul.mubr.bf16.gmra.mrb[0].mxu0 %v463
    %v911 = vpop.f32.mrb[0].mxu0
    %v912 = vadd.f32 0.0, %v911
    %v913 = vpop.f32.mrb[0].mxu0
    %v914 = vpop.f32.mrb[0].mxu0
    %v915 = vadd.f32 0.0, %v914
    %v916 = vpop.f32.mrb[0].mxu0
    %917 = vmatprep.mubr.bf16.mxu0 0
    %918 = vmatmul.mubr.bf16.gmra.mrb[0].mxu0 %v464
    %v919 = vpop.f32.mrb[0].mxu0
    %v920 = vadd.f32 0.0, %v919
    %v921 = vpop.f32.mrb[0].mxu0
    %v922 = vpop.f32.mrb[0].mxu0
    %v923 = vadd.f32 0.0, %v922
    %v924 = vpop.f32.mrb[0].mxu0
    %925 = vmatprep.mubr.bf16.mxu0 0
    %926 = vmatmul.mubr.bf16.gmra.mrb[0].mxu0 %v465
    %v927 = vpop.f32.mrb[0].mxu0
    %v928 = vadd.f32 0.0, %v927
    %v929 = vpop.f32.mrb[0].mxu0
    %v930 = vpop.f32.mrb[0].mxu0
    %v931 = vadd.f32 0.0, %v930
    %v932 = vpop.f32.mrb[0].mxu0
    %933 = vmatprep.mubr.bf16.mxu0 0
    %934 = vmatmul.mubr.bf16.gmra.mrb[0].mxu0 %v466
    %v935 = vpop.f32.mrb[0].mxu0
    %v936 = vadd.f32 0.0, %v935
    %v937 = vpop.f32.mrb[0].mxu0
    %v938 = vpop.f32.mrb[0].mxu0
    %v939 = vadd.f32 0.0, %v938
    %v940 = vpop.f32.mrb[0].mxu0
    %941 = vmatprep.mubr.bf16.mxu0 0
    %942 = vmatmul.mubr.bf16.gmra.mrb[0].mxu0 %v467
    %v943 = vpop.f32.mrb[0].mxu0
    %v944 = vadd.f32 0.0, %v943
    %v945 = vpop.f32.mrb[0].mxu0
    %v946 = vpop.f32.mrb[0].mxu0
    %v947 = vadd.f32 0.0, %v946
    %v948 = vpop.f32.mrb[0].mxu0
    %949 = vmatprep.mubr.bf16.mxu0 0
    %950 = vmatmul.mubr.bf16.gmra.mrb[0].mxu0 %v468
    %v951 = vpop.f32.mrb[0].mxu0
    %v952 = vadd.f32 0.0, %v951
    %v953 = vpop.f32.mrb[0].mxu0
    %v954 = vpop.f32.mrb[0].mxu0
    %v955 = vadd.f32 0.0, %v954
    %v956 = vpop.f32.mrb[0].mxu0
    %957 = vmatprep.mubr.bf16.mxu0 0
    %958 = vmatmul.mubr.bf16.gmra.mrb[0].mxu0 %v469
    %v959 = vpop.f32.mrb[0].mxu0
    %v960 = vadd.f32 0.0, %v959
    %v961 = vpop.f32.mrb[0].mxu0
    %v962 = vpop.f32.mrb[0].mxu0
    %v963 = vadd.f32 0.0, %v962
    %v964 = vpop.f32.mrb[0].mxu0
    %965 = vmatprep.mubr.bf16.mxu0 0
    %966 = vmatmul.mubr.bf16.gmra.mrb[0].mxu0 %v470
    %v967 = vpop.f32.mrb[0].mxu0
    %v968 = vadd.f32 0.0, %v967
    %v969 = vpop.f32.mrb[0].mxu0
    %v970 = vpop.f32.mrb[0].mxu0
    %v971 = vadd.f32 0.0, %v970
    %v972 = vpop.f32.mrb[0].mxu0
    %973 = vmatprep.mubr.bf16.mxu0 0
    %974 = vmatmul.mubr.bf16.gmra.mrb[0].mxu0 %v471
    %v975 = vpop.f32.mrb[0].mxu0
    %v976 = vadd.f32 0.0, %v975
    %v977 = vpop.f32.mrb[0].mxu0
    %v978 = vpop.f32.mrb[0].mxu0
    %v979 = vadd.f32 0.0, %v978
    %v980 = vpop.f32.mrb[0].mxu0
    %981 = vmatprep.mubr.bf16.mxu0 0
    %982 = vmatmul.mubr.bf16.gmra.mrb[0].mxu0 %v472
    %v983 = vpop.f32.mrb[0].mxu0
    %v984 = vadd.f32 0.0, %v983
    %v985 = vpop.f32.mrb[0].mxu0
    %v986 = vpop.f32.mrb[0].mxu0
    %v987 = vadd.f32 0.0, %v986
    %v988 = vpop.f32.mrb[0].mxu0
    %989 = vmatprep.mubr.bf16.mxu0 0
    %990 = vmatmul.mubr.bf16.gmra.mrb[0].mxu0 %v473
    %v991 = vpop.f32.mrb[0].mxu0
    %v992 = vadd.f32 0.0, %v991
    %v993 = vpop.f32.mrb[0].mxu0
    %v994 = vpop.f32.mrb[0].mxu0
    %v995 = vadd.f32 0.0, %v994
    %v996 = vpop.f32.mrb[0].mxu0
    %997 = vmatprep.mubr.bf16.mxu0 0
    %998 = vmatmul.mubr.bf16.gmra.mrb[0].mxu0 %v474
    %v999 = vpop.f32.mrb[0].mxu0
    %v1000 = vadd.f32 0.0, %v999
    %v1001 = vpop.f32.mrb[0].mxu0
    %v1002 = vpop.f32.mrb[0].mxu0
    %v1003 = vadd.f32 0.0, %v1002
    %v1004 = vpop.f32.mrb[0].mxu0
    %1005 = vmatprep.mubr.bf16.mxu0 0
    %1006 = vmatmul.mubr.bf16.gmra.mrb[0].mxu0 %v475
    %v1007 = vpop.f32.mrb[0].mxu0
    %v1008 = vadd.f32 0.0, %v1007
    %v1009 = vpop.f32.mrb[0].mxu0
    %v1010 = vpop.f32.mrb[0].mxu0
    %v1011 = vadd.f32 0.0, %v1010
    %v1012 = vpop.f32.mrb[0].mxu0
    %1013 = vmatprep.mubr.bf16.mxu0 0
    %1014 = vmatmul.mubr.bf16.gmra.mrb[0].mxu0 %v476
    %v1015 = vpop.f32.mrb[0].mxu0
    %v1016 = vadd.f32 0.0, %v1015
    %v1017 = vpop.f32.mrb[0].mxu0
    %v1018 = vpop.f32.mrb[0].mxu0
    %v1019 = vadd.f32 0.0, %v1018
    %v1020 = vpop.f32.mrb[0].mxu0
    %1021 = vmatprep.mubr.bf16.mxu0 0
    %1022 = vmatmul.mubr.bf16.gmra.mrb[0].mxu0 %v477
    %v1023 = vpop.f32.mrb[0].mxu0
    %v1024 = vadd.f32 0.0, %v1023
    %v1025 = vpop.f32.mrb[0].mxu0
    %v1026 = vpop.f32.mrb[0].mxu0
    %v1027 = vadd.f32 0.0, %v1026
    %v1028 = vpop.f32.mrb[0].mxu0
    %1029 = vmatprep.mubr.bf16.mxu0 0
    %1030 = vmatmul.mubr.bf16.gmra.mrb[0].mxu0 %v478
    %v1031 = vpop.f32.mrb[0].mxu0
    %v1032 = vadd.f32 0.0, %v1031
    %v1033 = vpop.f32.mrb[0].mxu0
    %v1034 = vpop.f32.mrb[0].mxu0
    %v1035 = vadd.f32 0.0, %v1034
    %v1036 = vpop.f32.mrb[0].mxu0
    %1037 = vmatprep.mubr.bf16.mxu0 0
    %1038 = vmatmul.mubr.bf16.gmra.mrb[0].mxu0 %v479
    %v1039 = vpop.f32.mrb[0].mxu0
    %v1040 = vadd.f32 0.0, %v1039
    %v1041 = vpop.f32.mrb[0].mxu0
    %v1042 = vpop.f32.mrb[0].mxu0
    %v1043 = vadd.f32 0.0, %v1042
    %v1044 = vpop.f32.mrb[0].mxu0
    %1045 = vmatprep.mubr.bf16.mxu0 0
    %1046 = vmatmul.mubr.bf16.gmra.mrb[0].mxu0 %v480
    %v1047 = vpop.f32.mrb[0].mxu0
    %v1048 = vadd.f32 0.0, %v1047
    %v1049 = vpop.f32.mrb[0].mxu0
    %v1050 = vpop.f32.mrb[0].mxu0
    %v1051 = vadd.f32 0.0, %v1050
    %v1052 = vpop.f32.mrb[0].mxu0
    %1053 = vmatprep.mubr.bf16.mxu0 0
    %1054 = vmatmul.mubr.bf16.gmra.mrb[0].mxu0 %v481
    %v1055 = vpop.f32.mrb[0].mxu0
    %v1056 = vadd.f32 0.0, %v1055
    %v1057 = vpop.f32.mrb[0].mxu0
    %v1058 = vpop.f32.mrb[0].mxu0
    %v1059 = vadd.f32 0.0, %v1058
    %v1060 = vpop.f32.mrb[0].mxu0
    %1061 = vmatprep.mubr.bf16.mxu0 0
    %1062 = vmatmul.mubr.bf16.gmra.mrb[0].mxu0 %v482
    %v1063 = vpop.f32.mrb[0].mxu0
    %v1064 = vadd.f32 0.0, %v1063
    %v1065 = vpop.f32.mrb[0].mxu0
    %v1066 = vpop.f32.mrb[0].mxu0
    %v1067 = vadd.f32 0.0, %v1066
    %v1068 = vpop.f32.mrb[0].mxu0
    %1069 = vmatprep.mubr.bf16.mxu0 0
    %1070 = vmatmul.mubr.bf16.gmra.mrb[0].mxu0 %v483
    %v1071 = vpop.f32.mrb[0].mxu0
    %v1072 = vadd.f32 0.0, %v1071
    %v1073 = vpop.f32.mrb[0].mxu0
    %v1074 = vpop.f32.mrb[0].mxu0
    %v1075 = vadd.f32 0.0, %v1074
    %v1076 = vpop.f32.mrb[0].mxu0
    %1077 = vmatprep.mubr.bf16.mxu0 0
    %1078 = vmatmul.mubr.bf16.gmra.mrb[0].mxu0 %v484
    %v1079 = vpop.f32.mrb[0].mxu0
    %v1080 = vadd.f32 0.0, %v1079
    %v1081 = vpop.f32.mrb[0].mxu0
    %v1082 = vpop.f32.mrb[0].mxu0
    %v1083 = vadd.f32 0.0, %v1082
    %v1084 = vpop.f32.mrb[0].mxu0
    %1085 = vmatprep.mubr.bf16.mxu0 0
    %1086 = vmatmul.mubr.bf16.gmra.mrb[0].mxu0 %v485
    %v1087 = vpop.f32.mrb[0].mxu0
    %v1088 = vadd.f32 0.0, %v1087
    %v1089 = vpop.f32.mrb[0].mxu0
    %v1090 = vpop.f32.mrb[0].mxu0
    %v1091 = vadd.f32 0.0, %v1090
    %v1092 = vpop.f32.mrb[0].mxu0
    %1093 = vmatprep.mubr.bf16.mxu0 0
    %1094 = vmatmul.mubr.bf16.gmra.mrb[0].mxu0 %v486
    %v1095 = vpop.f32.mrb[0].mxu0
    %v1096 = vadd.f32 0.0, %v1095
    %v1097 = vpop.f32.mrb[0].mxu0
    %v1098 = vpop.f32.mrb[0].mxu0
    %v1099 = vadd.f32 0.0, %v1098
    %v1100 = vpop.f32.mrb[0].mxu0
    %1101 = vmatprep.mubr.bf16.mxu0 0
    %1102 = vmatmul.mubr.bf16.gmra.mrb[0].mxu0 %v487
    %v1103 = vpop.f32.mrb[0].mxu0
    %v1104 = vadd.f32 0.0, %v1103
    %v1105 = vpop.f32.mrb[0].mxu0
    %v1106 = vpop.f32.mrb[0].mxu0
    %v1107 = vadd.f32 0.0, %v1106
    %v1108 = vpop.f32.mrb[0].mxu0
    %1109 = vmatprep.mubr.bf16.mxu0 0
    %1110 = vmatmul.mubr.bf16.gmra.mrb[0].mxu0 %v488
    %v1111 = vpop.f32.mrb[0].mxu0
    %v1112 = vadd.f32 0.0, %v1111
    %v1113 = vpop.f32.mrb[0].mxu0
    %v1114 = vpop.f32.mrb[0].mxu0
    %v1115 = vadd.f32 0.0, %v1114
    %v1116 = vpop.f32.mrb[0].mxu0
    %1117 = vmatprep.mubr.bf16.mxu0 0
    %1118 = vmatmul.mubr.bf16.gmra.mrb[0].mxu0 %v489
    %v1119 = vpop.f32.mrb[0].mxu0
    %v1120 = vadd.f32 0.0, %v1119
    %v1121 = vpop.f32.mrb[0].mxu0
    %v1122 = vpop.f32.mrb[0].mxu0
    %v1123 = vadd.f32 0.0, %v1122
    %v1124 = vpop.f32.mrb[0].mxu0
    %1125 = vmatprep.mubr.bf16.mxu0 0
    %1126 = vmatmul.mubr.bf16.gmra.mrb[0].mxu0 %v490
    %v1127 = vpop.f32.mrb[0].mxu0
    %v1128 = vadd.f32 0.0, %v1127
    %v1129 = vpop.f32.mrb[0].mxu0
    %v1130 = vpop.f32.mrb[0].mxu0
    %v1131 = vadd.f32 0.0, %v1130
    %v1132 = vpop.f32.mrb[0].mxu0
    %1133 = vmatprep.mubr.bf16.mxu0 0
    %1134 = vmatmul.mubr.bf16.gmra.mrb[0].mxu0 %v491
    %v1135 = vpop.f32.mrb[0].mxu0
    %v1136 = vadd.f32 0.0, %v1135
    %v1137 = vpop.f32.mrb[0].mxu0
    %v1138 = vpop.f32.mrb[0].mxu0
    %v1139 = vadd.f32 0.0, %v1138
    %v1140 = vpop.f32.mrb[0].mxu0
    %1141 = vmatprep.mubr.bf16.mxu0 0
    %1142 = vmatmul.mubr.bf16.gmra.mrb[0].mxu0 %v492
    %v1143 = vpop.f32.mrb[0].mxu0
    %v1144 = vadd.f32 0.0, %v1143
    %v1145 = vpop.f32.mrb[0].mxu0
    %v1146 = vpop.f32.mrb[0].mxu0
    %v1147 = vadd.f32 0.0, %v1146
    %v1148 = vpop.f32.mrb[0].mxu0
    %1149 = vdwg.mxu0
    %vm1150 = vcmask 64512
    %1151 = vst.msk [vmem:[%s2] sm:$0xff] %vm1150, %v640
    %1152 = vst.msk [vmem:[%s2 + $0x8] sm:$0xff] %vm1150, %v643
    %1153 = vst.msk [vmem:[%s2 + $0x10] sm:$0xff] %vm1150, %v648
    %1154 = vst.msk [vmem:[%s2 + $0x18] sm:$0xff] %vm1150, %v651
    %1155 = vst.msk [vmem:[%s2 + $0x20] sm:$0xff] %vm1150, %v656
    %1156 = vst.msk [vmem:[%s2 + $0x28] sm:$0xff] %vm1150, %v659
    %1157 = vst.msk [vmem:[%s2 + $0x30] sm:$0xff] %vm1150, %v664
    %1158 = vst.msk [vmem:[%s2 + $0x38] sm:$0xff] %vm1150, %v667
    %1159 = vst.msk [vmem:[%s2 + $0x40] sm:$0xff] %vm1150, %v672
    %1160 = vst.msk [vmem:[%s2 + $0x48] sm:$0xff] %vm1150, %v675
    %1161 = vst.msk [vmem:[%s2 + $0x50] sm:$0xff] %vm1150, %v680
    %1162 = vst.msk [vmem:[%s2 + $0x58] sm:$0xff] %vm1150, %v683
    %1163 = vst.msk [vmem:[%s2 + $0x60] sm:$0xff] %vm1150, %v688
    %1164 = vst.msk [vmem:[%s2 + $0x68] sm:$0xff] %vm1150, %v691
    %1165 = vst.msk [vmem:[%s2 + $0x70] sm:$0xff] %vm1150, %v696
    %1166 = vst.msk [vmem:[%s2 + $0x78] sm:$0xff] %vm1150, %v699
    %1167 = vst.msk [vmem:[%s2 + $0x80] sm:$0xff] %vm1150, %v704
    %1168 = vst.msk [vmem:[%s2 + $0x88] sm:$0xff] %vm1150, %v707
    %1169 = vst.msk [vmem:[%s2 + $0x90] sm:$0xff] %vm1150, %v712
    %1170 = vst.msk [vmem:[%s2 + $0x98] sm:$0xff] %vm1150, %v715
    %1171 = vst.msk [vmem:[%s2 + $0xa0] sm:$0xff] %vm1150, %v720
    %1172 = vst.msk [vmem:[%s2 + $0xa8] sm:$0xff] %vm1150, %v723
    %1173 = vst.msk [vmem:[%s2 + $0xb0] sm:$0xff] %vm1150, %v728
    %1174 = vst.msk [vmem:[%s2 + $0xb8] sm:$0xff] %vm1150, %v731
    %1175 = vst.msk [vmem:[%s2 + $0xc0] sm:$0xff] %vm1150, %v736
    %1176 = vst.msk [vmem:[%s2 + $0xc8] sm:$0xff] %vm1150, %v739
    %1177 = vst.msk [vmem:[%s2 + $0xd0] sm:$0xff] %vm1150, %v744
    %1178 = vst.msk [vmem:[%s2 + $0xd8] sm:$0xff] %vm1150, %v747
    %1179 = vst.msk [vmem:[%s2 + $0xe0] sm:$0xff] %vm1150, %v752
    %1180 = vst.msk [vmem:[%s2 + $0xe8] sm:$0xff] %vm1150, %v755
    %1181 = vst.msk [vmem:[%s2 + $0xf0] sm:$0xff] %vm1150, %v760
    %1182 = vst.msk [vmem:[%s2 + $0xf8] sm:$0xff] %vm1150, %v763
    %1183 = vst.msk [vmem:[%s2 + $0x100] sm:$0xff] %vm1150, %v768
    %1184 = vst.msk [vmem:[%s2 + $0x108] sm:$0xff] %vm1150, %v771
    %1185 = vst.msk [vmem:[%s2 + $0x110] sm:$0xff] %vm1150, %v776
    %1186 = vst.msk [vmem:[%s2 + $0x118] sm:$0xff] %vm1150, %v779
    %1187 = vst.msk [vmem:[%s2 + $0x120] sm:$0xff] %vm1150, %v784
    %1188 = vst.msk [vmem:[%s2 + $0x128] sm:$0xff] %vm1150, %v787
    %1189 = vst.msk [vmem:[%s2 + $0x130] sm:$0xff] %vm1150, %v792
    %1190 = vst.msk [vmem:[%s2 + $0x138] sm:$0xff] %vm1150, %v795
    %1191 = vst.msk [vmem:[%s2 + $0x140] sm:$0xff] %vm1150, %v800
    %1192 = vst.msk [vmem:[%s2 + $0x148] sm:$0xff] %vm1150, %v803
    %1193 = vst.msk [vmem:[%s2 + $0x150] sm:$0xff] %vm1150, %v808
    %1194 = vst.msk [vmem:[%s2 + $0x158] sm:$0xff] %vm1150, %v811
    %1195 = vst.msk [vmem:[%s2 + $0x160] sm:$0xff] %vm1150, %v816
    %1196 = vst.msk [vmem:[%s2 + $0x168] sm:$0xff] %vm1150, %v819
    %1197 = vst.msk [vmem:[%s2 + $0x170] sm:$0xff] %vm1150, %v824
    %1198 = vst.msk [vmem:[%s2 + $0x178] sm:$0xff] %vm1150, %v827
    %1199 = vst.msk [vmem:[%s2 + $0x180] sm:$0xff] %vm1150, %v832
    %1200 = vst.msk [vmem:[%s2 + $0x188] sm:$0xff] %vm1150, %v835
    %1201 = vst.msk [vmem:[%s2 + $0x190] sm:$0xff] %vm1150, %v840
    %1202 = vst.msk [vmem:[%s2 + $0x198] sm:$0xff] %vm1150, %v843
    %1203 = vst.msk [vmem:[%s2 + $0x1a0] sm:$0xff] %vm1150, %v848
    %1204 = vst.msk [vmem:[%s2 + $0x1a8] sm:$0xff] %vm1150, %v851
    %1205 = vst.msk [vmem:[%s2 + $0x1b0] sm:$0xff] %vm1150, %v856
    %1206 = vst.msk [vmem:[%s2 + $0x1b8] sm:$0xff] %vm1150, %v859
    %1207 = vst.msk [vmem:[%s2 + $0x1c0] sm:$0xff] %vm1150, %v864
    %1208 = vst.msk [vmem:[%s2 + $0x1c8] sm:$0xff] %vm1150, %v867
    %1209 = vst.msk [vmem:[%s2 + $0x1d0] sm:$0xff] %vm1150, %v872
    %1210 = vst.msk [vmem:[%s2 + $0x1d8] sm:$0xff] %vm1150, %v875
    %1211 = vst.msk [vmem:[%s2 + $0x1e0] sm:$0xff] %vm1150, %v880
    %1212 = vst.msk [vmem:[%s2 + $0x1e8] sm:$0xff] %vm1150, %v883
    %1213 = vst.msk [vmem:[%s2 + $0x1f0] sm:$0xff] %vm1150, %v888
    %1214 = vst.msk [vmem:[%s2 + $0x1f8] sm:$0xff] %vm1150, %v891
    %1215 = vst.msk [vmem:[%s2 + $0x200] sm:$0xff] %vm1150, %v896
    %1216 = vst.msk [vmem:[%s2 + $0x208] sm:$0xff] %vm1150, %v899
    %1217 = vst.msk [vmem:[%s2 + $0x210] sm:$0xff] %vm1150, %v904
    %1218 = vst.msk [vmem:[%s2 + $0x218] sm:$0xff] %vm1150, %v907
    %1219 = vst.msk [vmem:[%s2 + $0x220] sm:$0xff] %vm1150, %v912
    %1220 = vst.msk [vmem:[%s2 + $0x228] sm:$0xff] %vm1150, %v915
    %1221 = vst.msk [vmem:[%s2 + $0x230] sm:$0xff] %vm1150, %v920
    %1222 = vst.msk [vmem:[%s2 + $0x238] sm:$0xff] %vm1150, %v923
    %1223 = vst.msk [vmem:[%s2 + $0x240] sm:$0xff] %vm1150, %v928
    %1224 = vst.msk [vmem:[%s2 + $0x248] sm:$0xff] %vm1150, %v931
    %1225 = vst.msk [vmem:[%s2 + $0x250] sm:$0xff] %vm1150, %v936
    %1226 = vst.msk [vmem:[%s2 + $0x258] sm:$0xff] %vm1150, %v939
    %1227 = vst.msk [vmem:[%s2 + $0x260] sm:$0xff] %vm1150, %v944
    %1228 = vst.msk [vmem:[%s2 + $0x268] sm:$0xff] %vm1150, %v947
    %1229 = vst.msk [vmem:[%s2 + $0x270] sm:$0xff] %vm1150, %v952
    %1230 = vst.msk [vmem:[%s2 + $0x278] sm:$0xff] %vm1150, %v955
    %1231 = vst.msk [vmem:[%s2 + $0x280] sm:$0xff] %vm1150, %v960
    %1232 = vst.msk [vmem:[%s2 + $0x288] sm:$0xff] %vm1150, %v963
    %1233 = vst.msk [vmem:[%s2 + $0x290] sm:$0xff] %vm1150, %v968
    %1234 = vst.msk [vmem:[%s2 + $0x298] sm:$0xff] %vm1150, %v971
    %1235 = vst.msk [vmem:[%s2 + $0x2a0] sm:$0xff] %vm1150, %v976
    %1236 = vst.msk [vmem:[%s2 + $0x2a8] sm:$0xff] %vm1150, %v979
    %1237 = vst.msk [vmem:[%s2 + $0x2b0] sm:$0xff] %vm1150, %v984
    %1238 = vst.msk [vmem:[%s2 + $0x2b8] sm:$0xff] %vm1150, %v987
    %1239 = vst.msk [vmem:[%s2 + $0x2c0] sm:$0xff] %vm1150, %v992
    %1240 = vst.msk [vmem:[%s2 + $0x2c8] sm:$0xff] %vm1150, %v995
    %1241 = vst.msk [vmem:[%s2 + $0x2d0] sm:$0xff] %vm1150, %v1000
    %1242 = vst.msk [vmem:[%s2 + $0x2d8] sm:$0xff] %vm1150, %v1003
    %1243 = vst.msk [vmem:[%s2 + $0x2e0] sm:$0xff] %vm1150, %v1008
    %1244 = vst.msk [vmem:[%s2 + $0x2e8] sm:$0xff] %vm1150, %v1011
    %1245 = vst.msk [vmem:[%s2 + $0x2f0] sm:$0xff] %vm1150, %v1016
    %1246 = vst.msk [vmem:[%s2 + $0x2f8] sm:$0xff] %vm1150, %v1019
    %1247 = vst.msk [vmem:[%s2 + $0x300] sm:$0xff] %vm1150, %v1024
    %1248 = vst.msk [vmem:[%s2 + $0x308] sm:$0xff] %vm1150, %v1027
    %1249 = vst.msk [vmem:[%s2 + $0x310] sm:$0xff] %vm1150, %v1032
    %1250 = vst.msk [vmem:[%s2 + $0x318] sm:$0xff] %vm1150, %v1035
    %1251 = vst.msk [vmem:[%s2 + $0x320] sm:$0xff] %vm1150, %v1040
    %1252 = vst.msk [vmem:[%s2 + $0x328] sm:$0xff] %vm1150, %v1043
    %1253 = vst.msk [vmem:[%s2 + $0x330] sm:$0xff] %vm1150, %v1048
    %1254 = vst.msk [vmem:[%s2 + $0x338] sm:$0xff] %vm1150, %v1051
    %1255 = vst.msk [vmem:[%s2 + $0x340] sm:$0xff] %vm1150, %v1056
    %1256 = vst.msk [vmem:[%s2 + $0x348] sm:$0xff] %vm1150, %v1059
    %1257 = vst.msk [vmem:[%s2 + $0x350] sm:$0xff] %vm1150, %v1064
    %1258 = vst.msk [vmem:[%s2 + $0x358] sm:$0xff] %vm1150, %v1067
    %1259 = vst.msk [vmem:[%s2 + $0x360] sm:$0xff] %vm1150, %v1072
    %1260 = vst.msk [vmem:[%s2 + $0x368] sm:$0xff] %vm1150, %v1075
    %1261 = vst.msk [vmem:[%s2 + $0x370] sm:$0xff] %vm1150, %v1080
    %1262 = vst.msk [vmem:[%s2 + $0x378] sm:$0xff] %vm1150, %v1083
    %1263 = vst.msk [vmem:[%s2 + $0x380] sm:$0xff] %vm1150, %v1088
    %1264 = vst.msk [vmem:[%s2 + $0x388] sm:$0xff] %vm1150, %v1091
    %1265 = vst.msk [vmem:[%s2 + $0x390] sm:$0xff] %vm1150, %v1096
    %1266 = vst.msk [vmem:[%s2 + $0x398] sm:$0xff] %vm1150, %v1099
    %1267 = vst.msk [vmem:[%s2 + $0x3a0] sm:$0xff] %vm1150, %v1104
    %1268 = vst.msk [vmem:[%s2 + $0x3a8] sm:$0xff] %vm1150, %v1107
    %1269 = vst.msk [vmem:[%s2 + $0x3b0] sm:$0xff] %vm1150, %v1112
    %1270 = vst.msk [vmem:[%s2 + $0x3b8] sm:$0xff] %vm1150, %v1115
    %1271 = vst.msk [vmem:[%s2 + $0x3c0] sm:$0xff] %vm1150, %v1120
    %1272 = vst.msk [vmem:[%s2 + $0x3c8] sm:$0xff] %vm1150, %v1123
    %1273 = vst.msk [vmem:[%s2 + $0x3d0] sm:$0xff] %vm1150, %v1128
    %1274 = vst.msk [vmem:[%s2 + $0x3d8] sm:$0xff] %vm1150, %v1131
    %1275 = vst.msk [vmem:[%s2 + $0x3e0] sm:$0xff] %vm1150, %v1136
    %1276 = vst.msk [vmem:[%s2 + $0x3e8] sm:$0xff] %vm1150, %v1139
    %1277 = vst.msk [vmem:[%s2 + $0x3f0] sm:$0xff] %vm1150, %v1144
    %1278 = vst.msk [vmem:[%s2 + $0x3f8] sm:$0xff] %vm1150, %v1147
    %1279 = vst.msk [vmem:[#allocation5] sm:$0xff] %vm1150, 0.0
    %v1280 = vsel %vm1150, %v640, 0.0
    %v1281 = vsel %vm1150, %v643, 0.0
    %v1282 = vadd.f32 %v1280, %v1281
    %v1283 = vsel %vm1150, %v648, 0.0
    %v1284 = vadd.f32 %v1282, %v1283
    %v1285 = vsel %vm1150, %v651, 0.0
    %v1286 = vadd.f32 %v1284, %v1285
    %v1287 = vsel %vm1150, %v656, 0.0
    %v1288 = vadd.f32 %v1286, %v1287
    %v1289 = vsel %vm1150, %v659, 0.0
    %v1290 = vadd.f32 %v1288, %v1289
    %v1291 = vsel %vm1150, %v664, 0.0
    %v1292 = vadd.f32 %v1290, %v1291
    %v1293 = vsel %vm1150, %v667, 0.0
    %v1294 = vadd.f32 %v1292, %v1293
    %v1295 = vsel %vm1150, %v672, 0.0
    %v1296 = vadd.f32 %v1294, %v1295
    %v1297 = vsel %vm1150, %v675, 0.0
    %v1298 = vadd.f32 %v1296, %v1297
    %v1299 = vsel %vm1150, %v680, 0.0
    %v1300 = vadd.f32 %v1298, %v1299
    %v1301 = vsel %vm1150, %v683, 0.0
    %v1302 = vadd.f32 %v1300, %v1301
    %v1303 = vsel %vm1150, %v688, 0.0
    %v1304 = vadd.f32 %v1302, %v1303
    %v1305 = vsel %vm1150, %v691, 0.0
    %v1306 = vadd.f32 %v1304, %v1305
    %v1307 = vsel %vm1150, %v696, 0.0
    %v1308 = vadd.f32 %v1306, %v1307
    %v1309 = vsel %vm1150, %v699, 0.0
    %v1310 = vadd.f32 %v1308, %v1309
    %v1311 = vsel %vm1150, %v704, 0.0
    %v1312 = vadd.f32 %v1310, %v1311
    %v1313 = vsel %vm1150, %v707, 0.0
    %v1314 = vadd.f32 %v1312, %v1313
    %v1315 = vsel %vm1150, %v712, 0.0
    %v1316 = vadd.f32 %v1314, %v1315
    %v1317 = vsel %vm1150, %v715, 0.0
    %v1318 = vadd.f32 %v1316, %v1317
    %v1319 = vsel %vm1150, %v720, 0.0
    %v1320 = vadd.f32 %v1318, %v1319
    %v1321 = vsel %vm1150, %v723, 0.0
    %v1322 = vadd.f32 %v1320, %v1321
    %v1323 = vsel %vm1150, %v728, 0.0
    %v1324 = vadd.f32 %v1322, %v1323
    %v1325 = vsel %vm1150, %v731, 0.0
    %v1326 = vadd.f32 %v1324, %v1325
    %v1327 = vsel %vm1150, %v736, 0.0
    %v1328 = vadd.f32 %v1326, %v1327
    %v1329 = vsel %vm1150, %v739, 0.0
    %v1330 = vadd.f32 %v1328, %v1329
    %v1331 = vsel %vm1150, %v744, 0.0
    %v1332 = vadd.f32 %v1330, %v1331
    %v1333 = vsel %vm1150, %v747, 0.0
    %v1334 = vadd.f32 %v1332, %v1333
    %v1335 = vsel %vm1150, %v752, 0.0
    %v1336 = vadd.f32 %v1334, %v1335
    %v1337 = vsel %vm1150, %v755, 0.0
    %v1338 = vadd.f32 %v1336, %v1337
    %v1339 = vsel %vm1150, %v760, 0.0
    %v1340 = vadd.f32 %v1338, %v1339
    %v1341 = vsel %vm1150, %v763, 0.0
    %v1342 = vadd.f32 %v1340, %v1341
    %v1343 = vsel %vm1150, %v768, 0.0
    %v1344 = vadd.f32 %v1342, %v1343
    %v1345 = vsel %vm1150, %v771, 0.0
    %v1346 = vadd.f32 %v1344, %v1345
    %v1347 = vsel %vm1150, %v776, 0.0
    %v1348 = vadd.f32 %v1346, %v1347
    %v1349 = vsel %vm1150, %v779, 0.0
    %v1350 = vadd.f32 %v1348, %v1349
    %v1351 = vsel %vm1150, %v784, 0.0
    %v1352 = vadd.f32 %v1350, %v1351
    %v1353 = vsel %vm1150, %v787, 0.0
    %v1354 = vadd.f32 %v1352, %v1353
    %v1355 = vsel %vm1150, %v792, 0.0
    %v1356 = vadd.f32 %v1354, %v1355
    %v1357 = vsel %vm1150, %v795, 0.0
    %v1358 = vadd.f32 %v1356, %v1357
    %v1359 = vsel %vm1150, %v800, 0.0
    %v1360 = vadd.f32 %v1358, %v1359
    %v1361 = vsel %vm1150, %v803, 0.0
    %v1362 = vadd.f32 %v1360, %v1361
    %v1363 = vsel %vm1150, %v808, 0.0
    %v1364 = vadd.f32 %v1362, %v1363
    %v1365 = vsel %vm1150, %v811, 0.0
    %v1366 = vadd.f32 %v1364, %v1365
    %v1367 = vsel %vm1150, %v816, 0.0
    %v1368 = vadd.f32 %v1366, %v1367
    %v1369 = vsel %vm1150, %v819, 0.0
    %v1370 = vadd.f32 %v1368, %v1369
    %v1371 = vsel %vm1150, %v824, 0.0
    %v1372 = vadd.f32 %v1370, %v1371
    %v1373 = vsel %vm1150, %v827, 0.0
    %v1374 = vadd.f32 %v1372, %v1373
    %v1375 = vsel %vm1150, %v832, 0.0
    %v1376 = vadd.f32 %v1374, %v1375
    %v1377 = vsel %vm1150, %v835, 0.0
    %v1378 = vadd.f32 %v1376, %v1377
    %v1379 = vsel %vm1150, %v840, 0.0
    %v1380 = vadd.f32 %v1378, %v1379
    %v1381 = vsel %vm1150, %v843, 0.0
    %v1382 = vadd.f32 %v1380, %v1381
    %v1383 = vsel %vm1150, %v848, 0.0
    %v1384 = vadd.f32 %v1382, %v1383
    %v1385 = vsel %vm1150, %v851, 0.0
    %v1386 = vadd.f32 %v1384, %v1385
    %v1387 = vsel %vm1150, %v856, 0.0
    %v1388 = vadd.f32 %v1386, %v1387
    %v1389 = vsel %vm1150, %v859, 0.0
    %v1390 = vadd.f32 %v1388, %v1389
    %v1391 = vsel %vm1150, %v864, 0.0
    %v1392 = vadd.f32 %v1390, %v1391
    %v1393 = vsel %vm1150, %v867, 0.0
    %v1394 = vadd.f32 %v1392, %v1393
    %v1395 = vsel %vm1150, %v872, 0.0
    %v1396 = vadd.f32 %v1394, %v1395
    %v1397 = vsel %vm1150, %v875, 0.0
    %v1398 = vadd.f32 %v1396, %v1397
    %v1399 = vsel %vm1150, %v880, 0.0
    %v1400 = vadd.f32 %v1398, %v1399
    %v1401 = vsel %vm1150, %v883, 0.0
    %v1402 = vadd.f32 %v1400, %v1401
    %v1403 = vsel %vm1150, %v888, 0.0
    %v1404 = vadd.f32 %v1402, %v1403
    %v1405 = vsel %vm1150, %v891, 0.0
    %v1406 = vadd.f32 %v1404, %v1405
    %v1407 = vsel %vm1150, %v896, 0.0
    %v1408 = vadd.f32 %v1406, %v1407
    %v1409 = vsel %vm1150, %v899, 0.0
    %v1410 = vadd.f32 %v1408, %v1409
    %v1411 = vsel %vm1150, %v904, 0.0
    %v1412 = vadd.f32 %v1410, %v1411
    %v1413 = vsel %vm1150, %v907, 0.0
    %v1414 = vadd.f32 %v1412, %v1413
    %v1415 = vsel %vm1150, %v912, 0.0
    %v1416 = vadd.f32 %v1414, %v1415
    %v1417 = vsel %vm1150, %v915, 0.0
    %v1418 = vadd.f32 %v1416, %v1417
    %v1419 = vsel %vm1150, %v920, 0.0
    %v1420 = vadd.f32 %v1418, %v1419
    %v1421 = vsel %vm1150, %v923, 0.0
    %v1422 = vadd.f32 %v1420, %v1421
    %v1423 = vsel %vm1150, %v928, 0.0
    %v1424 = vadd.f32 %v1422, %v1423
    %v1425 = vsel %vm1150, %v931, 0.0
    %v1426 = vadd.f32 %v1424, %v1425
    %v1427 = vsel %vm1150, %v936, 0.0
    %v1428 = vadd.f32 %v1426, %v1427
    %v1429 = vsel %vm1150, %v939, 0.0
    %v1430 = vadd.f32 %v1428, %v1429
    %v1431 = vsel %vm1150, %v944, 0.0
    %v1432 = vadd.f32 %v1430, %v1431
    %v1433 = vsel %vm1150, %v947, 0.0
    %v1434 = vadd.f32 %v1432, %v1433
    %v1435 = vsel %vm1150, %v952, 0.0
    %v1436 = vadd.f32 %v1434, %v1435
    %v1437 = vsel %vm1150, %v955, 0.0
    %v1438 = vadd.f32 %v1436, %v1437
    %v1439 = vsel %vm1150, %v960, 0.0
    %v1440 = vadd.f32 %v1438, %v1439
    %v1441 = vsel %vm1150, %v963, 0.0
    %v1442 = vadd.f32 %v1440, %v1441
    %v1443 = vsel %vm1150, %v968, 0.0
    %v1444 = vadd.f32 %v1442, %v1443
    %v1445 = vsel %vm1150, %v971, 0.0
    %v1446 = vadd.f32 %v1444, %v1445
    %v1447 = vsel %vm1150, %v976, 0.0
    %v1448 = vadd.f32 %v1446, %v1447
    %v1449 = vsel %vm1150, %v979, 0.0
    %v1450 = vadd.f32 %v1448, %v1449
    %v1451 = vsel %vm1150, %v984, 0.0
    %v1452 = vadd.f32 %v1450, %v1451
    %v1453 = vsel %vm1150, %v987, 0.0
    %v1454 = vadd.f32 %v1452, %v1453
    %v1455 = vsel %vm1150, %v992, 0.0
    %v1456 = vadd.f32 %v1454, %v1455
    %v1457 = vsel %vm1150, %v995, 0.0
    %v1458 = vadd.f32 %v1456, %v1457
    %v1459 = vsel %vm1150, %v1000, 0.0
    %v1460 = vadd.f32 %v1458, %v1459
    %v1461 = vsel %vm1150, %v1003, 0.0
    %v1462 = vadd.f32 %v1460, %v1461
    %v1463 = vsel %vm1150, %v1008, 0.0
    %v1464 = vadd.f32 %v1462, %v1463
    %v1465 = vsel %vm1150, %v1011, 0.0
    %v1466 = vadd.f32 %v1464, %v1465
    %v1467 = vsel %vm1150, %v1016, 0.0
    %v1468 = vadd.f32 %v1466, %v1467
    %v1469 = vsel %vm1150, %v1019, 0.0
    %v1470 = vadd.f32 %v1468, %v1469
    %v1471 = vsel %vm1150, %v1024, 0.0
    %v1472 = vadd.f32 %v1470, %v1471
    %v1473 = vsel %vm1150, %v1027, 0.0
    %v1474 = vadd.f32 %v1472, %v1473
    %v1475 = vsel %vm1150, %v1032, 0.0
    %v1476 = vadd.f32 %v1474, %v1475
    %v1477 = vsel %vm1150, %v1035, 0.0
    %v1478 = vadd.f32 %v1476, %v1477
    %v1479 = vsel %vm1150, %v1040, 0.0
    %v1480 = vadd.f32 %v1478, %v1479
    %v1481 = vsel %vm1150, %v1043, 0.0
    %v1482 = vadd.f32 %v1480, %v1481
    %v1483 = vsel %vm1150, %v1048, 0.0
    %v1484 = vadd.f32 %v1482, %v1483
    %v1485 = vsel %vm1150, %v1051, 0.0
    %v1486 = vadd.f32 %v1484, %v1485
    %v1487 = vsel %vm1150, %v1056, 0.0
    %v1488 = vadd.f32 %v1486, %v1487
    %v1489 = vsel %vm1150, %v1059, 0.0
    %v1490 = vadd.f32 %v1488, %v1489
    %v1491 = vsel %vm1150, %v1064, 0.0
    %v1492 = vadd.f32 %v1490, %v1491
    %v1493 = vsel %vm1150, %v1067, 0.0
    %v1494 = vadd.f32 %v1492, %v1493
    %v1495 = vsel %vm1150, %v1072, 0.0
    %v1496 = vadd.f32 %v1494, %v1495
    %v1497 = vsel %vm1150, %v1075, 0.0
    %v1498 = vadd.f32 %v1496, %v1497
    %v1499 = vsel %vm1150, %v1080, 0.0
    %v1500 = vadd.f32 %v1498, %v1499
    %v1501 = vsel %vm1150, %v1083, 0.0
    %v1502 = vadd.f32 %v1500, %v1501
    %v1503 = vsel %vm1150, %v1088, 0.0
    %v1504 = vadd.f32 %v1502, %v1503
    %v1505 = vsel %vm1150, %v1091, 0.0
    %v1506 = vadd.f32 %v1504, %v1505
    %v1507 = vsel %vm1150, %v1096, 0.0
    %v1508 = vadd.f32 %v1506, %v1507
    %v1509 = vsel %vm1150, %v1099, 0.0
    %v1510 = vadd.f32 %v1508, %v1509
    %v1511 = vsel %vm1150, %v1104, 0.0
    %v1512 = vadd.f32 %v1510, %v1511
    %v1513 = vsel %vm1150, %v1107, 0.0
    %v1514 = vadd.f32 %v1512, %v1513
    %v1515 = vsel %vm1150, %v1112, 0.0
    %v1516 = vadd.f32 %v1514, %v1515
    %v1517 = vsel %vm1150, %v1115, 0.0
    %v1518 = vadd.f32 %v1516, %v1517
    %v1519 = vsel %vm1150, %v1120, 0.0
    %v1520 = vadd.f32 %v1518, %v1519
    %v1521 = vsel %vm1150, %v1123, 0.0
    %v1522 = vadd.f32 %v1520, %v1521
    %v1523 = vsel %vm1150, %v1128, 0.0
    %v1524 = vadd.f32 %v1522, %v1523
    %v1525 = vsel %vm1150, %v1131, 0.0
    %v1526 = vadd.f32 %v1524, %v1525
    %v1527 = vsel %vm1150, %v1136, 0.0
    %v1528 = vadd.f32 %v1526, %v1527
    %v1529 = vsel %vm1150, %v1139, 0.0
    %v1530 = vadd.f32 %v1528, %v1529
    %v1531 = vsel %vm1150, %v1144, 0.0
    %v1532 = vadd.f32 %v1530, %v1531
    %v1533 = vsel %vm1150, %v1147, 0.0
    %v1534 = vadd.f32 %v1532, %v1533
    %v1535 = vrot.slane %v1534, 4
    %v1536 = vadd.f32 %v1534, %v1535
    %v1537 = vrot.slane %v1536, 2
    %v1538 = vadd.f32 %v1536, %v1537
    %v1539 = vrot.slane %v1538, 1
    %v1540 = vadd.f32 %v1538, %v1539
    %vm1541 = vcmask 57344
    %1542 = vst.msk [vmem:[#allocation5] sm:$0x1] %vm1541, %v1540
    %v1543 = vmul.f32 %v640, %v640
    %v1544 = vmul.f32 %v643, %v643
    %v1545 = vmul.f32 %v648, %v648
    %v1546 = vmul.f32 %v651, %v651
    %v1547 = vmul.f32 %v656, %v656
    %v1548 = vmul.f32 %v659, %v659
    %v1549 = vmul.f32 %v664, %v664
    %v1550 = vmul.f32 %v667, %v667
    %v1551 = vmul.f32 %v672, %v672
    %v1552 = vmul.f32 %v675, %v675
    %v1553 = vmul.f32 %v680, %v680
    %v1554 = vmul.f32 %v683, %v683
    %v1555 = vmul.f32 %v688, %v688
    %v1556 = vmul.f32 %v691, %v691
    %v1557 = vmul.f32 %v696, %v696
    %v1558 = vmul.f32 %v699, %v699
    %v1559 = vmul.f32 %v704, %v704
    %v1560 = vmul.f32 %v707, %v707
    %v1561 = vmul.f32 %v712, %v712
    %v1562 = vmul.f32 %v715, %v715
    %v1563 = vmul.f32 %v720, %v720
    %v1564 = vmul.f32 %v723, %v723
    %v1565 = vmul.f32 %v728, %v728
    %v1566 = vmul.f32 %v731, %v731
    %v1567 = vmul.f32 %v736, %v736
    %v1568 = vmul.f32 %v739, %v739
    %v1569 = vmul.f32 %v744, %v744
    %v1570 = vmul.f32 %v747, %v747
    %v1571 = vmul.f32 %v752, %v752
    %v1572 = vmul.f32 %v755, %v755
    %v1573 = vmul.f32 %v760, %v760
    %v1574 = vmul.f32 %v763, %v763
    %v1575 = vmul.f32 %v768, %v768
    %v1576 = vmul.f32 %v771, %v771
    %v1577 = vmul.f32 %v776, %v776
    %v1578 = vmul.f32 %v779, %v779
    %v1579 = vmul.f32 %v784, %v784
    %v1580 = vmul.f32 %v787, %v787
    %v1581 = vmul.f32 %v792, %v792
    %v1582 = vmul.f32 %v795, %v795
    %v1583 = vmul.f32 %v800, %v800
    %v1584 = vmul.f32 %v803, %v803
    %v1585 = vmul.f32 %v808, %v808
    %v1586 = vmul.f32 %v811, %v811
    %v1587 = vmul.f32 %v816, %v816
    %v1588 = vmul.f32 %v819, %v819
    %v1589 = vmul.f32 %v824, %v824
    %v1590 = vmul.f32 %v827, %v827
    %v1591 = vmul.f32 %v832, %v832
    %v1592 = vmul.f32 %v835, %v835
    %v1593 = vmul.f32 %v840, %v840
    %v1594 = vmul.f32 %v843, %v843
    %v1595 = vmul.f32 %v848, %v848
    %v1596 = vmul.f32 %v851, %v851
    %v1597 = vmul.f32 %v856, %v856
    %v1598 = vmul.f32 %v859, %v859
    %v1599 = vmul.f32 %v864, %v864
    %v1600 = vmul.f32 %v867, %v867
    %v1601 = vmul.f32 %v872, %v872
    %v1602 = vmul.f32 %v875, %v875
    %v1603 = vmul.f32 %v880, %v880
    %v1604 = vmul.f32 %v883, %v883
    %v1605 = vmul.f32 %v888, %v888
    %v1606 = vmul.f32 %v891, %v891
    %v1607 = vmul.f32 %v896, %v896
    %v1608 = vmul.f32 %v899, %v899
    %v1609 = vmul.f32 %v904, %v904
    %v1610 = vmul.f32 %v907, %v907
    %v1611 = vmul.f32 %v912, %v912
    %v1612 = vmul.f32 %v915, %v915
    %v1613 = vmul.f32 %v920, %v920
    %v1614 = vmul.f32 %v923, %v923
    %v1615 = vmul.f32 %v928, %v928
    %v1616 = vmul.f32 %v931, %v931
    %v1617 = vmul.f32 %v936, %v936
    %v1618 = vmul.f32 %v939, %v939
    %v1619 = vmul.f32 %v944, %v944
    %v1620 = vmul.f32 %v947, %v947
    %v1621 = vmul.f32 %v952, %v952
    %v1622 = vmul.f32 %v955, %v955
    %v1623 = vmul.f32 %v960, %v960
    %v1624 = vmul.f32 %v963, %v963
    %v1625 = vmul.f32 %v968, %v968
    %v1626 = vmul.f32 %v971, %v971
    %v1627 = vmul.f32 %v976, %v976
    %v1628 = vmul.f32 %v979, %v979
    %v1629 = vmul.f32 %v984, %v984
    %v1630 = vmul.f32 %v987, %v987
    %v1631 = vmul.f32 %v992, %v992
    %v1632 = vmul.f32 %v995, %v995
    %v1633 = vmul.f32 %v1000, %v1000
    %v1634 = vmul.f32 %v1003, %v1003
    %v1635 = vmul.f32 %v1008, %v1008
    %v1636 = vmul.f32 %v1011, %v1011
    %v1637 = vmul.f32 %v1016, %v1016
    %v1638 = vmul.f32 %v1019, %v1019
    %v1639 = vmul.f32 %v1024, %v1024
    %v1640 = vmul.f32 %v1027, %v1027
    %v1641 = vmul.f32 %v1032, %v1032
    %v1642 = vmul.f32 %v1035, %v1035
    %v1643 = vmul.f32 %v1040, %v1040
    %v1644 = vmul.f32 %v1043, %v1043
    %v1645 = vmul.f32 %v1048, %v1048
    %v1646 = vmul.f32 %v1051, %v1051
    %v1647 = vmul.f32 %v1056, %v1056
    %v1648 = vmul.f32 %v1059, %v1059
    %v1649 = vmul.f32 %v1064, %v1064
    %v1650 = vmul.f32 %v1067, %v1067
    %v1651 = vmul.f32 %v1072, %v1072
    %v1652 = vmul.f32 %v1075, %v1075
    %v1653 = vmul.f32 %v1080, %v1080
    %v1654 = vmul.f32 %v1083, %v1083
    %v1655 = vmul.f32 %v1088, %v1088
    %v1656 = vmul.f32 %v1091, %v1091
    %v1657 = vmul.f32 %v1096, %v1096
    %v1658 = vmul.f32 %v1099, %v1099
    %v1659 = vmul.f32 %v1104, %v1104
    %v1660 = vmul.f32 %v1107, %v1107
    %v1661 = vmul.f32 %v1112, %v1112
    %v1662 = vmul.f32 %v1115, %v1115
    %v1663 = vmul.f32 %v1120, %v1120
    %v1664 = vmul.f32 %v1123, %v1123
    %v1665 = vmul.f32 %v1128, %v1128
    %v1666 = vmul.f32 %v1131, %v1131
    %v1667 = vmul.f32 %v1136, %v1136
    %v1668 = vmul.f32 %v1139, %v1139
    %v1669 = vmul.f32 %v1144, %v1144
    %v1670 = vmul.f32 %v1147, %v1147
    %v1671 = vsel %vm1150, %v1543, 0.0
    %v1672 = vsel %vm1150, %v1544, 0.0
    %v1673 = vadd.f32 %v1671, %v1672
    %v1674 = vsel %vm1150, %v1545, 0.0
    %v1675 = vadd.f32 %v1673, %v1674
    %v1676 = vsel %vm1150, %v1546, 0.0
    %v1677 = vadd.f32 %v1675, %v1676
    %v1678 = vsel %vm1150, %v1547, 0.0
    %v1679 = vadd.f32 %v1677, %v1678
    %v1680 = vsel %vm1150, %v1548, 0.0
    %v1681 = vadd.f32 %v1679, %v1680
    %v1682 = vsel %vm1150, %v1549, 0.0
    %v1683 = vadd.f32 %v1681, %v1682
    %v1684 = vsel %vm1150, %v1550, 0.0
    %v1685 = vadd.f32 %v1683, %v1684
    %v1686 = vsel %vm1150, %v1551, 0.0
    %v1687 = vadd.f32 %v1685, %v1686
    %v1688 = vsel %vm1150, %v1552, 0.0
    %v1689 = vadd.f32 %v1687, %v1688
    %v1690 = vsel %vm1150, %v1553, 0.0
    %v1691 = vadd.f32 %v1689, %v1690
    %v1692 = vsel %vm1150, %v1554, 0.0
    %v1693 = vadd.f32 %v1691, %v1692
    %v1694 = vsel %vm1150, %v1555, 0.0
    %v1695 = vadd.f32 %v1693, %v1694
    %v1696 = vsel %vm1150, %v1556, 0.0
    %v1697 = vadd.f32 %v1695, %v1696
    %v1698 = vsel %vm1150, %v1557, 0.0
    %v1699 = vadd.f32 %v1697, %v1698
    %v1700 = vsel %vm1150, %v1558, 0.0
    %v1701 = vadd.f32 %v1699, %v1700
    %v1702 = vsel %vm1150, %v1559, 0.0
    %v1703 = vadd.f32 %v1701, %v1702
    %v1704 = vsel %vm1150, %v1560, 0.0
    %v1705 = vadd.f32 %v1703, %v1704
    %v1706 = vsel %vm1150, %v1561, 0.0
    %v1707 = vadd.f32 %v1705, %v1706
    %v1708 = vsel %vm1150, %v1562, 0.0
    %v1709 = vadd.f32 %v1707, %v1708
    %v1710 = vsel %vm1150, %v1563, 0.0
    %v1711 = vadd.f32 %v1709, %v1710
    %v1712 = vsel %vm1150, %v1564, 0.0
    %v1713 = vadd.f32 %v1711, %v1712
    %v1714 = vsel %vm1150, %v1565, 0.0
    %v1715 = vadd.f32 %v1713, %v1714
    %v1716 = vsel %vm1150, %v1566, 0.0
    %v1717 = vadd.f32 %v1715, %v1716
    %v1718 = vsel %vm1150, %v1567, 0.0
    %v1719 = vadd.f32 %v1717, %v1718
    %v1720 = vsel %vm1150, %v1568, 0.0
    %v1721 = vadd.f32 %v1719, %v1720
    %v1722 = vsel %vm1150, %v1569, 0.0
    %v1723 = vadd.f32 %v1721, %v1722
    %v1724 = vsel %vm1150, %v1570, 0.0
    %v1725 = vadd.f32 %v1723, %v1724
    %v1726 = vsel %vm1150, %v1571, 0.0
    %v1727 = vadd.f32 %v1725, %v1726
    %v1728 = vsel %vm1150, %v1572, 0.0
    %v1729 = vadd.f32 %v1727, %v1728
    %v1730 = vsel %vm1150, %v1573, 0.0
    %v1731 = vadd.f32 %v1729, %v1730
    %v1732 = vsel %vm1150, %v1574, 0.0
    %v1733 = vadd.f32 %v1731, %v1732
    %v1734 = vsel %vm1150, %v1575, 0.0
    %v1735 = vadd.f32 %v1733, %v1734
    %v1736 = vsel %vm1150, %v1576, 0.0
    %v1737 = vadd.f32 %v1735, %v1736
    %v1738 = vsel %vm1150, %v1577, 0.0
    %v1739 = vadd.f32 %v1737, %v1738
    %v1740 = vsel %vm1150, %v1578, 0.0
    %v1741 = vadd.f32 %v1739, %v1740
    %v1742 = vsel %vm1150, %v1579, 0.0
    %v1743 = vadd.f32 %v1741, %v1742
    %v1744 = vsel %vm1150, %v1580, 0.0
    %v1745 = vadd.f32 %v1743, %v1744
    %v1746 = vsel %vm1150, %v1581, 0.0
    %v1747 = vadd.f32 %v1745, %v1746
    %v1748 = vsel %vm1150, %v1582, 0.0
    %v1749 = vadd.f32 %v1747, %v1748
    %v1750 = vsel %vm1150, %v1583, 0.0
    %v1751 = vadd.f32 %v1749, %v1750
    %v1752 = vsel %vm1150, %v1584, 0.0
    %v1753 = vadd.f32 %v1751, %v1752
    %v1754 = vsel %vm1150, %v1585, 0.0
    %v1755 = vadd.f32 %v1753, %v1754
    %v1756 = vsel %vm1150, %v1586, 0.0
    %v1757 = vadd.f32 %v1755, %v1756
    %v1758 = vsel %vm1150, %v1587, 0.0
    %v1759 = vadd.f32 %v1757, %v1758
    %v1760 = vsel %vm1150, %v1588, 0.0
    %v1761 = vadd.f32 %v1759, %v1760
    %v1762 = vsel %vm1150, %v1589, 0.0
    %v1763 = vadd.f32 %v1761, %v1762
    %v1764 = vsel %vm1150, %v1590, 0.0
    %v1765 = vadd.f32 %v1763, %v1764
    %v1766 = vsel %vm1150, %v1591, 0.0
    %v1767 = vadd.f32 %v1765, %v1766
    %v1768 = vsel %vm1150, %v1592, 0.0
    %v1769 = vadd.f32 %v1767, %v1768
    %v1770 = vsel %vm1150, %v1593, 0.0
    %v1771 = vadd.f32 %v1769, %v1770
    %v1772 = vsel %vm1150, %v1594, 0.0
    %v1773 = vadd.f32 %v1771, %v1772
    %v1774 = vsel %vm1150, %v1595, 0.0
    %v1775 = vadd.f32 %v1773, %v1774
    %v1776 = vsel %vm1150, %v1596, 0.0
    %v1777 = vadd.f32 %v1775, %v1776
    %v1778 = vsel %vm1150, %v1597, 0.0
    %v1779 = vadd.f32 %v1777, %v1778
    %v1780 = vsel %vm1150, %v1598, 0.0
    %v1781 = vadd.f32 %v1779, %v1780
    %v1782 = vsel %vm1150, %v1599, 0.0
    %v1783 = vadd.f32 %v1781, %v1782
    %v1784 = vsel %vm1150, %v1600, 0.0
    %v1785 = vadd.f32 %v1783, %v1784
    %v1786 = vsel %vm1150, %v1601, 0.0
    %v1787 = vadd.f32 %v1785, %v1786
    %v1788 = vsel %vm1150, %v1602, 0.0
    %v1789 = vadd.f32 %v1787, %v1788
    %v1790 = vsel %vm1150, %v1603, 0.0
    %v1791 = vadd.f32 %v1789, %v1790
    %v1792 = vsel %vm1150, %v1604, 0.0
    %v1793 = vadd.f32 %v1791, %v1792
    %v1794 = vsel %vm1150, %v1605, 0.0
    %v1795 = vadd.f32 %v1793, %v1794
    %v1796 = vsel %vm1150, %v1606, 0.0
    %v1797 = vadd.f32 %v1795, %v1796
    %v1798 = vsel %vm1150, %v1607, 0.0
    %v1799 = vadd.f32 %v1797, %v1798
    %v1800 = vsel %vm1150, %v1608, 0.0
    %v1801 = vadd.f32 %v1799, %v1800
    %v1802 = vsel %vm1150, %v1609, 0.0
    %v1803 = vadd.f32 %v1801, %v1802
    %v1804 = vsel %vm1150, %v1610, 0.0
    %v1805 = vadd.f32 %v1803, %v1804
    %v1806 = vsel %vm1150, %v1611, 0.0
    %v1807 = vadd.f32 %v1805, %v1806
    %v1808 = vsel %vm1150, %v1612, 0.0
    %v1809 = vadd.f32 %v1807, %v1808
    %v1810 = vsel %vm1150, %v1613, 0.0
    %v1811 = vadd.f32 %v1809, %v1810
    %v1812 = vsel %vm1150, %v1614, 0.0
    %v1813 = vadd.f32 %v1811, %v1812
    %v1814 = vsel %vm1150, %v1615, 0.0
    %v1815 = vadd.f32 %v1813, %v1814
    %v1816 = vsel %vm1150, %v1616, 0.0
    %v1817 = vadd.f32 %v1815, %v1816
    %v1818 = vsel %vm1150, %v1617, 0.0
    %v1819 = vadd.f32 %v1817, %v1818
    %v1820 = vsel %vm1150, %v1618, 0.0
    %v1821 = vadd.f32 %v1819, %v1820
    %v1822 = vsel %vm1150, %v1619, 0.0
    %v1823 = vadd.f32 %v1821, %v1822
    %v1824 = vsel %vm1150, %v1620, 0.0
    %v1825 = vadd.f32 %v1823, %v1824
    %v1826 = vsel %vm1150, %v1621, 0.0
    %v1827 = vadd.f32 %v1825, %v1826
    %v1828 = vsel %vm1150, %v1622, 0.0
    %v1829 = vadd.f32 %v1827, %v1828
    %v1830 = vsel %vm1150, %v1623, 0.0
    %v1831 = vadd.f32 %v1829, %v1830
    %v1832 = vsel %vm1150, %v1624, 0.0
    %v1833 = vadd.f32 %v1831, %v1832
    %v1834 = vsel %vm1150, %v1625, 0.0
    %v1835 = vadd.f32 %v1833, %v1834
    %v1836 = vsel %vm1150, %v1626, 0.0
    %v1837 = vadd.f32 %v1835, %v1836
    %v1838 = vsel %vm1150, %v1627, 0.0
    %v1839 = vadd.f32 %v1837, %v1838
    %v1840 = vsel %vm1150, %v1628, 0.0
    %v1841 = vadd.f32 %v1839, %v1840
    %v1842 = vsel %vm1150, %v1629, 0.0
    %v1843 = vadd.f32 %v1841, %v1842
    %v1844 = vsel %vm1150, %v1630, 0.0
    %v1845 = vadd.f32 %v1843, %v1844
    %v1846 = vsel %vm1150, %v1631, 0.0
    %v1847 = vadd.f32 %v1845, %v1846
    %v1848 = vsel %vm1150, %v1632, 0.0
    %v1849 = vadd.f32 %v1847, %v1848
    %v1850 = vsel %vm1150, %v1633, 0.0
    %v1851 = vadd.f32 %v1849, %v1850
    %v1852 = vsel %vm1150, %v1634, 0.0
    %v1853 = vadd.f32 %v1851, %v1852
    %v1854 = vsel %vm1150, %v1635, 0.0
    %v1855 = vadd.f32 %v1853, %v1854
    %v1856 = vsel %vm1150, %v1636, 0.0
    %v1857 = vadd.f32 %v1855, %v1856
    %v1858 = vsel %vm1150, %v1637, 0.0
    %v1859 = vadd.f32 %v1857, %v1858
    %v1860 = vsel %vm1150, %v1638, 0.0
    %v1861 = vadd.f32 %v1859, %v1860
    %v1862 = vsel %vm1150, %v1639, 0.0
    %v1863 = vadd.f32 %v1861, %v1862
    %v1864 = vsel %vm1150, %v1640, 0.0
    %v1865 = vadd.f32 %v1863, %v1864
    %v1866 = vsel %vm1150, %v1641, 0.0
    %v1867 = vadd.f32 %v1865, %v1866
    %v1868 = vsel %vm1150, %v1642, 0.0
    %v1869 = vadd.f32 %v1867, %v1868
    %v1870 = vsel %vm1150, %v1643, 0.0
    %v1871 = vadd.f32 %v1869, %v1870
    %v1872 = vsel %vm1150, %v1644, 0.0
    %v1873 = vadd.f32 %v1871, %v1872
    %v1874 = vsel %vm1150, %v1645, 0.0
    %v1875 = vadd.f32 %v1873, %v1874
    %v1876 = vsel %vm1150, %v1646, 0.0
    %v1877 = vadd.f32 %v1875, %v1876
    %v1878 = vsel %vm1150, %v1647, 0.0
    %v1879 = vadd.f32 %v1877, %v1878
    %v1880 = vsel %vm1150, %v1648, 0.0
    %v1881 = vadd.f32 %v1879, %v1880
    %v1882 = vsel %vm1150, %v1649, 0.0
    %v1883 = vadd.f32 %v1881, %v1882
    %v1884 = vsel %vm1150, %v1650, 0.0
    %v1885 = vadd.f32 %v1883, %v1884
    %v1886 = vsel %vm1150, %v1651, 0.0
    %v1887 = vadd.f32 %v1885, %v1886
    %v1888 = vsel %vm1150, %v1652, 0.0
    %v1889 = vadd.f32 %v1887, %v1888
    %v1890 = vsel %vm1150, %v1653, 0.0
    %v1891 = vadd.f32 %v1889, %v1890
    %v1892 = vsel %vm1150, %v1654, 0.0
    %v1893 = vadd.f32 %v1891, %v1892
    %v1894 = vsel %vm1150, %v1655, 0.0
    %v1895 = vadd.f32 %v1893, %v1894
    %v1896 = vsel %vm1150, %v1656, 0.0
    %v1897 = vadd.f32 %v1895, %v1896
    %v1898 = vsel %vm1150, %v1657, 0.0
    %v1899 = vadd.f32 %v1897, %v1898
    %v1900 = vsel %vm1150, %v1658, 0.0
    %v1901 = vadd.f32 %v1899, %v1900
    %v1902 = vsel %vm1150, %v1659, 0.0
    %v1903 = vadd.f32 %v1901, %v1902
    %v1904 = vsel %vm1150, %v1660, 0.0
    %v1905 = vadd.f32 %v1903, %v1904
    %v1906 = vsel %vm1150, %v1661, 0.0
    %v1907 = vadd.f32 %v1905, %v1906
    %v1908 = vsel %vm1150, %v1662, 0.0
    %v1909 = vadd.f32 %v1907, %v1908
    %v1910 = vsel %vm1150, %v1663, 0.0
    %v1911 = vadd.f32 %v1909, %v1910
    %v1912 = vsel %vm1150, %v1664, 0.0
    %v1913 = vadd.f32 %v1911, %v1912
    %v1914 = vsel %vm1150, %v1665, 0.0
    %v1915 = vadd.f32 %v1913, %v1914
    %v1916 = vsel %vm1150, %v1666, 0.0
    %v1917 = vadd.f32 %v1915, %v1916
    %v1918 = vsel %vm1150, %v1667, 0.0
    %v1919 = vadd.f32 %v1917, %v1918
    %v1920 = vsel %vm1150, %v1668, 0.0
    %v1921 = vadd.f32 %v1919, %v1920
    %v1922 = vsel %vm1150, %v1669, 0.0
    %v1923 = vadd.f32 %v1921, %v1922
    %v1924 = vsel %vm1150, %v1670, 0.0
    %v1925 = vadd.f32 %v1923, %v1924
    %v1926 = vrot.slane %v1925, 4
    %v1927 = vadd.f32 %v1925, %v1926
    %v1928 = vrot.slane %v1927, 2
    %v1929 = vadd.f32 %v1927, %v1928
    %v1930 = vrot.slane %v1929, 1
    %v1931 = vadd.f32 %v1929, %v1930
    %1932 = vst.msk [vmem:[#allocation5 + $0x1] sm:$0x1] %vm1541, %v1931
    // Predicated region
    $region14: #{tpu_custom_call.1} parent=1 // pred_check
      _
    $region15: #{tpu_custom_call.1} parent=1 // pred_check_branch
      %1934 = sbr.rel (0) target = $region17
    $region16: #{tpu_custom_call.1} parent=1 // pred_region
      _
    $region17: #{tpu_custom_call.1} parent=1 // pred_fallthru
      _
    // Predicated region
    $region18: #{tpu_custom_call.1} parent=1 // pred_check
      _
    $region19: #{tpu_custom_call.1} parent=1 // pred_check_branch
      %1936 = sbr.rel (0) target = $region21
    $region20: #{tpu_custom_call.1} parent=1 // pred_region
      %s1938 = ssub.s32 128, 128
      %1939 = vsyncadd [#allocation4], %s1938
      %s1941 = sshll.u32 [#allocation5], 4
      %s1942 = int_to_ptr.vmem [resolvable:$true] %s1941
      %1944 = dma.vmem_to_hbm [thread:$0]  %s1942, 128, %s3, [#allocation4]
    $region21: #{tpu_custom_call.1} parent=1 // pred_fallthru
      _
    // Predicated region
    $region22: #{tpu_custom_call.1} parent=1 // pred_check
      _
    $region23: #{tpu_custom_call.1} parent=1 // pred_check_branch
      %1946 = sbr.rel (0) target = $region25
    $region24: #{tpu_custom_call.1} parent=1 // pred_region
      _
    $region25: #{tpu_custom_call.1} parent=1 // pred_fallthru
      _
    // Predicated region
    $region26: #{tpu_custom_call.1} parent=1 // pred_check
      _
    $region27: #{tpu_custom_call.1} parent=1 // pred_check_branch
      %1948 = sbr.rel (0) target = $region29
    $region28: #{tpu_custom_call.1} parent=1 // pred_region
      %1949 = dma.done [#allocation4], 128
    $region29: #{tpu_custom_call.1} parent=1 // pred_fallthru
      _
    %1950 = vsyncpa [#allocation3], 1
    %1951 = vsyncpa [#allocation4], 1

</llo_original>
